<compile_context>
chip_gen: v7x
topology: tpu7x:2x2x1
jax: 0.10.0
libtpu: 0.0.40
codegen_flags: <defaults>
</compile_context>

<pallas_src>
import functools

import jax
import jax.numpy as jnp
from jax.experimental import pallas as pl
from jax.experimental.pallas import tpu as pltpu


def lstm_recurrence_kernel(x_ref, wih_ref, whh_ref, bias_ref, out_ref,
                           gx_ref, h_ref, c_ref, *,
                           chunk, hidden, in_size, matmul_dtype, unroll):
    """One (batch-tile, time-chunk) grid step of the LSTM recurrence.

    x_ref   : (St, bb, I)   f32  raw inputs for this time chunk
    wih_ref : (I, 4H)       f32  W_ih^T
    whh_ref : (H, 4H)       matmul_dtype  W_hh^T (pre-cast in wrapper)
    bias_ref: (1, 4H)       f32  b_ih + b_hh
    out_ref : (bb, H)       f32  hidden state at the last timestep
    gx_ref  : (St, bb, 4H)  f32  VMEM scratch: per-chunk gates_x
    h_ref/c_ref : (bb, H)   f32  VMEM scratch: state carried across chunks
    """
    H = hidden
    t_idx = pl.program_id(1)

    @pl.when(t_idx == 0)
    def _():
        h_ref[...] = jnp.zeros_like(h_ref)
        c_ref[...] = jnp.zeros_like(c_ref)

    # ---- chunk-level input projection (no serial dependency) -------------
    # With the module's tiny input_size (default 1) a K=1 MXU pass would be
    # wasted; a lane-broadcast multiply on the VPU per input channel is
    # exact and cheap.  Done once per chunk, off the recurrence chain.
    x = x_ref[...].astype(jnp.float32)                 # (St, bb, I)
    wih = wih_ref[...].astype(jnp.float32)             # (I, 4H)
    gx = x[:, :, 0:1] * wih[0:1, :]                    # (St, bb, 4H)
    for ii in range(1, in_size):
        gx = gx + x[:, :, ii:ii + 1] * wih[ii:ii + 1, :]
    gx_ref[...] = gx + bias_ref[...]

    # ---- serial recurrence over the chunk ---------------------------------
    whh = whh_ref[...]                                  # (H, 4H) matmul_dtype

    def step(t, carry):
        h, c = carry
        gates = gx_ref[t] + jnp.dot(h.astype(matmul_dtype), whh,
                                    preferred_element_type=jnp.float32)
        # PyTorch gate order [i, f, g, o]; 64-lane slices (XLU has slack).
        i_g = jax.nn.sigmoid(gates[:, 0 * H:1 * H])
        f_g = jax.nn.sigmoid(gates[:, 1 * H:2 * H])
        g_g = jnp.tanh(gates[:, 2 * H:3 * H])
        o_g = jax.nn.sigmoid(gates[:, 3 * H:4 * H])
        c_new = f_g * c + i_g * g_g
        h_new = o_g * jnp.tanh(c_new)
        return h_new, c_new

    h, c = jax.lax.fori_loop(0, chunk, step, (h_ref[...], c_ref[...]),
                             unroll=unroll)
    h_ref[...] = h
    c_ref[...] = c

    @pl.when(t_idx == pl.num_programs(1) - 1)
    def _():
        out_ref[...] = h


def _pick_batch_block(B, cap=64):
    # Batch tile: multiple of 8 (f32 sublanes) or the full batch; cap at 64
    # so per-step gates stay well inside the vreg file (review item).
    for cand in (cap, 32, 16, 8):
        if B >= cand and B % cand == 0:
            return cand
    return B


def _pick_time_chunk(S, cap=32):
    # Largest divisor of S that is <= cap; degenerate divisors (prime S, ...)
    # fall back to the whole sequence in one chunk.
    best = 1
    for cand in range(1, min(S, cap) + 1):
        if S % cand == 0:
            best = cand
    return best if best >= min(8, S) else S


def lstm_model_forward(x, w_ih, w_hh, b_ih, b_hh, w_fc, b_fc, *,
                       matmul_dtype=jnp.float32, time_chunk=32,
                       batch_block_cap=64, unroll=8):
    """x: (B, S, I) float32, batch_first like the PyTorch module."""
    B, S, I = x.shape
    four_h, H = w_hh.shape                     # PyTorch layout: (4H, H)
    assert four_h == 4 * H
    assert w_ih.shape == (4 * H, I)
    f32 = jnp.float32

    # ---- layout prep in XLA (cheap, one-time) -----------------------------
    x_sm = jnp.transpose(x, (1, 0, 2)).astype(f32)            # (S, B, I)
    wih_t = jnp.transpose(w_ih).astype(f32)                   # (I, 4H)
    whh_t = jnp.transpose(w_hh).astype(matmul_dtype)          # (H, 4H) pre-cast
    bias = (b_ih + b_hh).astype(f32).reshape(1, 4 * H)        # (1, 4H)

    bb = _pick_batch_block(B, batch_block_cap)
    st = _pick_time_chunk(S, time_chunk)
    assert B % bb == 0 and S % st == 0
    n_b, n_t = B // bb, S // st
    # TODO(synk): for v7x, choose bb = B/(2k) for large B so the "parallel"
    # batch axis has >=2 tiles and both TensorCores are used (B=2 demo: 1 tile).

    kernel = functools.partial(
        lstm_recurrence_kernel, chunk=st, hidden=H, in_size=I,
        matmul_dtype=matmul_dtype, unroll=min(unroll, st))

    h_last = pl.pallas_call(
        kernel,
        out_shape=jax.ShapeDtypeStruct((B, H), f32),
        grid_spec=pltpu.PrefetchScalarGridSpec(
            num_scalar_prefetch=0,
            grid=(n_b, n_t),                   # (batch tiles, time chunks)
            in_specs=[
                pl.BlockSpec((st, bb, I), lambda b, t: (t, b, 0)),   # x chunk
                pl.BlockSpec((I, 4 * H), lambda b, t: (0, 0)),       # W_ih^T
                pl.BlockSpec((H, 4 * H), lambda b, t: (0, 0)),       # W_hh^T
                pl.BlockSpec((1, 4 * H), lambda b, t: (0, 0)),       # bias
            ],
            out_specs=pl.BlockSpec((bb, H), lambda b, t: (b, 0)),    # h_last
            scratch_shapes=[
                pltpu.VMEM((st, bb, 4 * H), f32),   # gates_x for this chunk
                pltpu.VMEM((bb, H), f32),           # h carried across chunks
                pltpu.VMEM((bb, H), f32),           # c carried across chunks
            ],
        ),
        compiler_params=pltpu.CompilerParams(
            dimension_semantics=("parallel", "arbitrary"),
            vmem_limit_bytes=32 * 1024 * 1024,
        ),
    )(x_sm, wih_t, whh_t, bias)

    # ---- final Linear in XLA on the last hidden state ----------------------
    return jnp.matmul(h_last, jnp.transpose(w_fc)) + b_fc      # (B, 1)


def lstm_model_reference(x, w_ih, w_hh, b_ih, b_hh, w_fc, b_fc):
    """Pure-JAX reference mirroring nn.LSTM + nn.Linear semantics."""
    B, S, I = x.shape
    H = w_hh.shape[1]

    def step(carry, x_t):
        h, c = carry
        gates = x_t @ w_ih.T + b_ih + h @ w_hh.T + b_hh
        i_g = jax.nn.sigmoid(gates[:, 0 * H:1 * H])
        f_g = jax.nn.sigmoid(gates[:, 1 * H:2 * H])
        g_g = jnp.tanh(gates[:, 2 * H:3 * H])
        o_g = jax.nn.sigmoid(gates[:, 3 * H:4 * H])
        c_new = f_g * c + i_g * g_g
        h_new = o_g * jnp.tanh(c_new)
        return (h_new, c_new), None

    h0 = jnp.zeros((B, H), jnp.float32)
    c0 = jnp.zeros((B, H), jnp.float32)
    (h_last, _), _ = jax.lax.scan(step, (h0, c0), jnp.transpose(x, (1, 0, 2)))
    return h_last @ w_fc.T + b_fc


if __name__ == "__main__":
    # module hyperparameters (PyTorch defaults) + small demo shapes
    input_size, hidden_size, num_layers = 1, 64, 1
    batch, seq = 2, 8

    key = jax.random.PRNGKey(0)
    ks = jax.random.split(key, 7)
    bound = 1.0 / jnp.sqrt(hidden_size)      # PyTorch-style uniform init bound

    x = jax.random.normal(ks[0], (batch, seq, input_size), dtype=jnp.float32)
    w_ih = jax.random.uniform(ks[1], (4 * hidden_size, input_size),
                              minval=-bound, maxval=bound, dtype=jnp.float32)
    w_hh = jax.random.uniform(ks[2], (4 * hidden_size, hidden_size),
                              minval=-bound, maxval=bound, dtype=jnp.float32)
    b_ih = jax.random.uniform(ks[3], (4 * hidden_size,),
                              minval=-bound, maxval=bound, dtype=jnp.float32)
    b_hh = jax.random.uniform(ks[4], (4 * hidden_size,),
                              minval=-bound, maxval=bound, dtype=jnp.float32)
    w_fc = jax.random.uniform(ks[5], (1, hidden_size),
                              minval=-bound, maxval=bound, dtype=jnp.float32)
    b_fc = jax.random.uniform(ks[6], (1,),
                              minval=-bound, maxval=bound, dtype=jnp.float32)

    ref = jax.block_until_ready(
        lstm_model_reference(x, w_ih, w_hh, b_ih, b_hh, w_fc, b_fc))

    # f32 MXU-operand path (strict check)
    out_f32 = jax.block_until_ready(
        lstm_model_forward(x, w_ih, w_hh, b_ih, b_hh, w_fc, b_fc,
                           matmul_dtype=jnp.float32))
    assert out_f32.shape == (batch, 1)
    assert jnp.allclose(out_f32, ref, atol=1e-5, rtol=1e-5), (out_f32, ref)

    # bf16-operand MXU path (fast path on v5e/v6e/v7x); f32 accumulation and
    # f32 gate/state elementwise.  NOTE: re-validate drift at production S.
    out_bf16 = jax.block_until_ready(
        lstm_model_forward(x, w_ih, w_hh, b_ih, b_hh, w_fc, b_fc,
                           matmul_dtype=jnp.bfloat16))
    assert out_bf16.shape == (batch, 1)
    assert jnp.allclose(out_bf16, ref, atol=5e-2, rtol=5e-2), (out_bf16, ref)

    print("KERNEL_OK")
</pallas_src>

<mosaic_0001>
module attributes {stable_mosaic.version = 11 : i64} {
  func.func @lstm_recurrence_kernel(%arg0: i32, %arg1: i32, %arg2: memref<8x2x1xf32, #tpu.memory_space<vmem>>, %arg3: memref<1x256xf32, #tpu.memory_space<vmem>>, %arg4: memref<64x256xf32, #tpu.memory_space<vmem>>, %arg5: memref<1x256xf32, #tpu.memory_space<vmem>>, %arg6: memref<2x64xf32, #tpu.memory_space<vmem>>, %arg7: memref<8x2x256xf32, #tpu.memory_space<vmem>>, %arg8: memref<2x64xf32, #tpu.memory_space<vmem>>, %arg9: memref<2x64xf32, #tpu.memory_space<vmem>>) attributes {dimension_semantics = [#tpu.dimension_semantics<parallel>, #tpu.dimension_semantics<arbitrary>], iteration_bounds = array<i64: 1, 1>, scalar_prefetch = 0 : i64, scratch_operands = 3 : i64, tpu.core_type = #tpu.core_type<tc>, window_params = [{transform_indices = @transform_0, window_bounds = array<i64: 8, 2, 1>}, {pipeline_mode = #tpu.pipeline_mode<synchronous>, transform_indices = @transform_1, window_bounds = array<i64: 1, 256>}, {pipeline_mode = #tpu.pipeline_mode<synchronous>, transform_indices = @transform_2, window_bounds = array<i64: 64, 256>}, {pipeline_mode = #tpu.pipeline_mode<synchronous>, transform_indices = @transform_3, window_bounds = array<i64: 1, 256>}, {transform_indices = @transform_4, window_bounds = array<i64: 2, 64>}]} {
    %c0_i32 = arith.constant 0 : i32
    %0 = arith.cmpi eq, %arg1, %c0_i32 : i32
    %1 = arith.extui %0 : i1 to i32
    %c0_i32_0 = arith.constant 0 : i32
    %2 = arith.cmpi ne, %1, %c0_i32_0 : i32
    scf.if %2 {
      %cst_70 = arith.constant 0.000000e+00 : f32
      %262 = vector.broadcast %cst_70 : f32 to vector<2x64xf32>
      %c0_71 = arith.constant 0 : index
      %c0_72 = arith.constant 0 : index
      %263 = vector.load %arg8[%c0_71, %c0_72] : memref<2x64xf32, #tpu.memory_space<vmem>>, vector<2x64xf32>
      tpu.vector_store %arg8[%c0_71, %c0_72], %262 {strides = array<i32>} : memref<2x64xf32, #tpu.memory_space<vmem>>, vector<2x64xf32>,
      %cst_73 = arith.constant 0.000000e+00 : f32
      %264 = vector.broadcast %cst_73 : f32 to vector<2x64xf32>
      %c0_74 = arith.constant 0 : index
      %c0_75 = arith.constant 0 : index
      %265 = vector.load %arg9[%c0_74, %c0_75] : memref<2x64xf32, #tpu.memory_space<vmem>>, vector<2x64xf32>
      tpu.vector_store %arg9[%c0_74, %c0_75], %264 {strides = array<i32>} : memref<2x64xf32, #tpu.memory_space<vmem>>, vector<2x64xf32>,
    } else {
    }
    %c0 = arith.constant 0 : index
    %c0_1 = arith.constant 0 : index
    %c0_2 = arith.constant 0 : index
    %3 = vector.load %arg2[%c0, %c0_1, %c0_2] : memref<8x2x1xf32, #tpu.memory_space<vmem>>, vector<8x2x1xf32>
    %c0_3 = arith.constant 0 : index
    %c0_4 = arith.constant 0 : index
    %4 = vector.load %arg3[%c0_3, %c0_4] : memref<1x256xf32, #tpu.memory_space<vmem>>, vector<1x256xf32>
    %5 = vector.shape_cast %4 : vector<1x256xf32> to vector<1x1x256xf32>
    %6 = vector.broadcast %3 : vector<8x2x1xf32> to vector<8x2x256xf32>
    %7 = vector.broadcast %5 : vector<1x1x256xf32> to vector<8x2x256xf32>
    %8 = arith.mulf %6, %7 : vector<8x2x256xf32>
    %c0_5 = arith.constant 0 : index
    %c0_6 = arith.constant 0 : index
    %9 = vector.load %arg5[%c0_5, %c0_6] : memref<1x256xf32, #tpu.memory_space<vmem>>, vector<1x256xf32>
    %10 = vector.shape_cast %9 : vector<1x256xf32> to vector<1x1x256xf32>
    %11 = vector.broadcast %10 : vector<1x1x256xf32> to vector<8x2x256xf32>
    %12 = arith.addf %8, %11 : vector<8x2x256xf32>
    %c0_7 = arith.constant 0 : index
    %c0_8 = arith.constant 0 : index
    %c0_9 = arith.constant 0 : index
    %13 = vector.load %arg7[%c0_7, %c0_8, %c0_9] : memref<8x2x256xf32, #tpu.memory_space<vmem>>, vector<8x2x256xf32>
    tpu.vector_store %arg7[%c0_7, %c0_8, %c0_9], %12 {strides = array<i32>} : memref<8x2x256xf32, #tpu.memory_space<vmem>>, vector<8x2x256xf32>,
    %c0_10 = arith.constant 0 : index
    %c0_11 = arith.constant 0 : index
    %14 = vector.load %arg4[%c0_10, %c0_11] : memref<64x256xf32, #tpu.memory_space<vmem>>, vector<64x256xf32>
    %c0_12 = arith.constant 0 : index
    %c0_13 = arith.constant 0 : index
    %15 = vector.load %arg8[%c0_12, %c0_13] : memref<2x64xf32, #tpu.memory_space<vmem>>, vector<2x64xf32>
    %c0_14 = arith.constant 0 : index
    %c0_15 = arith.constant 0 : index
    %16 = vector.load %arg9[%c0_14, %c0_15] : memref<2x64xf32, #tpu.memory_space<vmem>>, vector<2x64xf32>
    %c0_i32_16 = arith.constant 0 : i32
    %17 = arith.index_cast %c0_i32_16 : i32 to index
    %c0_17 = arith.constant 0 : index
    %c0_18 = arith.constant 0 : index
    %18 = vector.load %arg7[%17, %c0_17, %c0_18] : memref<8x2x256xf32, #tpu.memory_space<vmem>>, vector<1x2x256xf32>
    %19 = vector.shape_cast %18 : vector<1x2x256xf32> to vector<2x256xf32>
    %cst = arith.constant dense<0.000000e+00> : vector<2x256xf32>
    %20 = tpu.matmul %15, %14, %cst {dimension_numbers = #tpu.dot_dimension_numbers<[1], [0], [0], [1], [0, 0, 1, 1], [], []>} : vector<2x64xf32>, vector<64x256xf32>, vector<2x256xf32> -> vector<2x256xf32>
    %21 = arith.addf %19, %20 : vector<2x256xf32>
    %22 = vector.extract_strided_slice %21 {offsets = [0, 0], sizes = [2, 64], strides = [1, 1]} : vector<2x256xf32> to vector<2x64xf32>
    %23 = arith.negf %22 : vector<2x64xf32>
    %24 = math.exp %23 : vector<2x64xf32>
    %cst_19 = arith.constant 1.000000e+00 : f32
    %25 = vector.broadcast %cst_19 : f32 to vector<2x64xf32>
    %26 = arith.addf %25, %24 : vector<2x64xf32>
    %27 = arith.divf %25, %26 : vector<2x64xf32>
    %28 = vector.extract_strided_slice %21 {offsets = [0, 64], sizes = [2, 64], strides = [1, 1]} : vector<2x256xf32> to vector<2x64xf32>
    %29 = arith.negf %28 : vector<2x64xf32>
    %30 = math.exp %29 : vector<2x64xf32>
    %cst_20 = arith.constant 1.000000e+00 : f32
    %31 = vector.broadcast %cst_20 : f32 to vector<2x64xf32>
    %32 = arith.addf %31, %30 : vector<2x64xf32>
    %33 = arith.divf %31, %32 : vector<2x64xf32>
    %34 = vector.extract_strided_slice %21 {offsets = [0, 128], sizes = [2, 64], strides = [1, 1]} : vector<2x256xf32> to vector<2x64xf32>
    %35 = math.tanh %34 : vector<2x64xf32>
    %36 = vector.extract_strided_slice %21 {offsets = [0, 192], sizes = [2, 64], strides = [1, 1]} : vector<2x256xf32> to vector<2x64xf32>
    %37 = arith.negf %36 : vector<2x64xf32>
    %38 = math.exp %37 : vector<2x64xf32>
    %cst_21 = arith.constant 1.000000e+00 : f32
    %39 = vector.broadcast %cst_21 : f32 to vector<2x64xf32>
    %40 = arith.addf %39, %38 : vector<2x64xf32>
    %41 = arith.divf %39, %40 : vector<2x64xf32>
    %42 = arith.mulf %33, %16 : vector<2x64xf32>
    %43 = arith.mulf %27, %35 : vector<2x64xf32>
    %44 = arith.addf %42, %43 : vector<2x64xf32>
    %45 = math.tanh %44 : vector<2x64xf32>
    %46 = arith.mulf %41, %45 : vector<2x64xf32>
    %c1_i32 = arith.constant 1 : i32
    %47 = arith.index_cast %c1_i32 : i32 to index
    %c0_22 = arith.constant 0 : index
    %c0_23 = arith.constant 0 : index
    %48 = vector.load %arg7[%47, %c0_22, %c0_23] : memref<8x2x256xf32, #tpu.memory_space<vmem>>, vector<1x2x256xf32>
    %49 = vector.shape_cast %48 : vector<1x2x256xf32> to vector<2x256xf32>
    %cst_24 = arith.constant dense<0.000000e+00> : vector<2x256xf32>
    %50 = tpu.matmul %46, %14, %cst_24 {dimension_numbers = #tpu.dot_dimension_numbers<[1], [0], [0], [1], [0, 0, 1, 1], [], []>} : vector<2x64xf32>, vector<64x256xf32>, vector<2x256xf32> -> vector<2x256xf32>
    %51 = arith.addf %49, %50 : vector<2x256xf32>
    %52 = vector.extract_strided_slice %51 {offsets = [0, 0], sizes = [2, 64], strides = [1, 1]} : vector<2x256xf32> to vector<2x64xf32>
    %53 = arith.negf %52 : vector<2x64xf32>
    %54 = math.exp %53 : vector<2x64xf32>
    %cst_25 = arith.constant 1.000000e+00 : f32
    %55 = vector.broadcast %cst_25 : f32 to vector<2x64xf32>
    %56 = arith.addf %55, %54 : vector<2x64xf32>
    %57 = arith.divf %55, %56 : vector<2x64xf32>
    %58 = vector.extract_strided_slice %51 {offsets = [0, 64], sizes = [2, 64], strides = [1, 1]} : vector<2x256xf32> to vector<2x64xf32>
    %59 = arith.negf %58 : vector<2x64xf32>
    %60 = math.exp %59 : vector<2x64xf32>
    %cst_26 = arith.constant 1.000000e+00 : f32
    %61 = vector.broadcast %cst_26 : f32 to vector<2x64xf32>
    %62 = arith.addf %61, %60 : vector<2x64xf32>
    %63 = arith.divf %61, %62 : vector<2x64xf32>
    %64 = vector.extract_strided_slice %51 {offsets = [0, 128], sizes = [2, 64], strides = [1, 1]} : vector<2x256xf32> to vector<2x64xf32>
    %65 = math.tanh %64 : vector<2x64xf32>
    %66 = vector.extract_strided_slice %51 {offsets = [0, 192], sizes = [2, 64], strides = [1, 1]} : vector<2x256xf32> to vector<2x64xf32>
    %67 = arith.negf %66 : vector<2x64xf32>
    %68 = math.exp %67 : vector<2x64xf32>
    %cst_27 = arith.constant 1.000000e+00 : f32
    %69 = vector.broadcast %cst_27 : f32 to vector<2x64xf32>
    %70 = arith.addf %69, %68 : vector<2x64xf32>
    %71 = arith.divf %69, %70 : vector<2x64xf32>
    %72 = arith.mulf %63, %44 : vector<2x64xf32>
    %73 = arith.mulf %57, %65 : vector<2x64xf32>
    %74 = arith.addf %72, %73 : vector<2x64xf32>
    %75 = math.tanh %74 : vector<2x64xf32>
    %76 = arith.mulf %71, %75 : vector<2x64xf32>
    %c2_i32 = arith.constant 2 : i32
    %77 = arith.index_cast %c2_i32 : i32 to index
    %c0_28 = arith.constant 0 : index
    %c0_29 = arith.constant 0 : index
    %78 = vector.load %arg7[%77, %c0_28, %c0_29] : memref<8x2x256xf32, #tpu.memory_space<vmem>>, vector<1x2x256xf32>
    %79 = vector.shape_cast %78 : vector<1x2x256xf32> to vector<2x256xf32>
    %cst_30 = arith.constant dense<0.000000e+00> : vector<2x256xf32>
    %80 = tpu.matmul %76, %14, %cst_30 {dimension_numbers = #tpu.dot_dimension_numbers<[1], [0], [0], [1], [0, 0, 1, 1], [], []>} : vector<2x64xf32>, vector<64x256xf32>, vector<2x256xf32> -> vector<2x256xf32>
    %81 = arith.addf %79, %80 : vector<2x256xf32>
    %82 = vector.extract_strided_slice %81 {offsets = [0, 0], sizes = [2, 64], strides = [1, 1]} : vector<2x256xf32> to vector<2x64xf32>
    %83 = arith.negf %82 : vector<2x64xf32>
    %84 = math.exp %83 : vector<2x64xf32>
    %cst_31 = arith.constant 1.000000e+00 : f32
    %85 = vector.broadcast %cst_31 : f32 to vector<2x64xf32>
    %86 = arith.addf %85, %84 : vector<2x64xf32>
    %87 = arith.divf %85, %86 : vector<2x64xf32>
    %88 = vector.extract_strided_slice %81 {offsets = [0, 64], sizes = [2, 64], strides = [1, 1]} : vector<2x256xf32> to vector<2x64xf32>
    %89 = arith.negf %88 : vector<2x64xf32>
    %90 = math.exp %89 : vector<2x64xf32>
    %cst_32 = arith.constant 1.000000e+00 : f32
    %91 = vector.broadcast %cst_32 : f32 to vector<2x64xf32>
    %92 = arith.addf %91, %90 : vector<2x64xf32>
    %93 = arith.divf %91, %92 : vector<2x64xf32>
    %94 = vector.extract_strided_slice %81 {offsets = [0, 128], sizes = [2, 64], strides = [1, 1]} : vector<2x256xf32> to vector<2x64xf32>
    %95 = math.tanh %94 : vector<2x64xf32>
    %96 = vector.extract_strided_slice %81 {offsets = [0, 192], sizes = [2, 64], strides = [1, 1]} : vector<2x256xf32> to vector<2x64xf32>
    %97 = arith.negf %96 : vector<2x64xf32>
    %98 = math.exp %97 : vector<2x64xf32>
    %cst_33 = arith.constant 1.000000e+00 : f32
    %99 = vector.broadcast %cst_33 : f32 to vector<2x64xf32>
    %100 = arith.addf %99, %98 : vector<2x64xf32>
    %101 = arith.divf %99, %100 : vector<2x64xf32>
    %102 = arith.mulf %93, %74 : vector<2x64xf32>
    %103 = arith.mulf %87, %95 : vector<2x64xf32>
    %104 = arith.addf %102, %103 : vector<2x64xf32>
    %105 = math.tanh %104 : vector<2x64xf32>
    %106 = arith.mulf %101, %105 : vector<2x64xf32>
    %c3_i32 = arith.constant 3 : i32
    %107 = arith.index_cast %c3_i32 : i32 to index
    %c0_34 = arith.constant 0 : index
    %c0_35 = arith.constant 0 : index
    %108 = vector.load %arg7[%107, %c0_34, %c0_35] : memref<8x2x256xf32, #tpu.memory_space<vmem>>, vector<1x2x256xf32>
    %109 = vector.shape_cast %108 : vector<1x2x256xf32> to vector<2x256xf32>
    %cst_36 = arith.constant dense<0.000000e+00> : vector<2x256xf32>
    %110 = tpu.matmul %106, %14, %cst_36 {dimension_numbers = #tpu.dot_dimension_numbers<[1], [0], [0], [1], [0, 0, 1, 1], [], []>} : vector<2x64xf32>, vector<64x256xf32>, vector<2x256xf32> -> vector<2x256xf32>
    %111 = arith.addf %109, %110 : vector<2x256xf32>
    %112 = vector.extract_strided_slice %111 {offsets = [0, 0], sizes = [2, 64], strides = [1, 1]} : vector<2x256xf32> to vector<2x64xf32>
    %113 = arith.negf %112 : vector<2x64xf32>
    %114 = math.exp %113 : vector<2x64xf32>
    %cst_37 = arith.constant 1.000000e+00 : f32
    %115 = vector.broadcast %cst_37 : f32 to vector<2x64xf32>
    %116 = arith.addf %115, %114 : vector<2x64xf32>
    %117 = arith.divf %115, %116 : vector<2x64xf32>
    %118 = vector.extract_strided_slice %111 {offsets = [0, 64], sizes = [2, 64], strides = [1, 1]} : vector<2x256xf32> to vector<2x64xf32>
    %119 = arith.negf %118 : vector<2x64xf32>
    %120 = math.exp %119 : vector<2x64xf32>
    %cst_38 = arith.constant 1.000000e+00 : f32
    %121 = vector.broadcast %cst_38 : f32 to vector<2x64xf32>
    %122 = arith.addf %121, %120 : vector<2x64xf32>
    %123 = arith.divf %121, %122 : vector<2x64xf32>
    %124 = vector.extract_strided_slice %111 {offsets = [0, 128], sizes = [2, 64], strides = [1, 1]} : vector<2x256xf32> to vector<2x64xf32>
    %125 = math.tanh %124 : vector<2x64xf32>
    %126 = vector.extract_strided_slice %111 {offsets = [0, 192], sizes = [2, 64], strides = [1, 1]} : vector<2x256xf32> to vector<2x64xf32>
    %127 = arith.negf %126 : vector<2x64xf32>
    %128 = math.exp %127 : vector<2x64xf32>
    %cst_39 = arith.constant 1.000000e+00 : f32
    %129 = vector.broadcast %cst_39 : f32 to vector<2x64xf32>
    %130 = arith.addf %129, %128 : vector<2x64xf32>
    %131 = arith.divf %129, %130 : vector<2x64xf32>
    %132 = arith.mulf %123, %104 : vector<2x64xf32>
    %133 = arith.mulf %117, %125 : vector<2x64xf32>
    %134 = arith.addf %132, %133 : vector<2x64xf32>
    %135 = math.tanh %134 : vector<2x64xf32>
    %136 = arith.mulf %131, %135 : vector<2x64xf32>
    %c4_i32 = arith.constant 4 : i32
    %137 = arith.index_cast %c4_i32 : i32 to index
    %c0_40 = arith.constant 0 : index
    %c0_41 = arith.constant 0 : index
    %138 = vector.load %arg7[%137, %c0_40, %c0_41] : memref<8x2x256xf32, #tpu.memory_space<vmem>>, vector<1x2x256xf32>
    %139 = vector.shape_cast %138 : vector<1x2x256xf32> to vector<2x256xf32>
    %cst_42 = arith.constant dense<0.000000e+00> : vector<2x256xf32>
    %140 = tpu.matmul %136, %14, %cst_42 {dimension_numbers = #tpu.dot_dimension_numbers<[1], [0], [0], [1], [0, 0, 1, 1], [], []>} : vector<2x64xf32>, vector<64x256xf32>, vector<2x256xf32> -> vector<2x256xf32>
    %141 = arith.addf %139, %140 : vector<2x256xf32>
    %142 = vector.extract_strided_slice %141 {offsets = [0, 0], sizes = [2, 64], strides = [1, 1]} : vector<2x256xf32> to vector<2x64xf32>
    %143 = arith.negf %142 : vector<2x64xf32>
    %144 = math.exp %143 : vector<2x64xf32>
    %cst_43 = arith.constant 1.000000e+00 : f32
    %145 = vector.broadcast %cst_43 : f32 to vector<2x64xf32>
    %146 = arith.addf %145, %144 : vector<2x64xf32>
    %147 = arith.divf %145, %146 : vector<2x64xf32>
    %148 = vector.extract_strided_slice %141 {offsets = [0, 64], sizes = [2, 64], strides = [1, 1]} : vector<2x256xf32> to vector<2x64xf32>
    %149 = arith.negf %148 : vector<2x64xf32>
    %150 = math.exp %149 : vector<2x64xf32>
    %cst_44 = arith.constant 1.000000e+00 : f32
    %151 = vector.broadcast %cst_44 : f32 to vector<2x64xf32>
    %152 = arith.addf %151, %150 : vector<2x64xf32>
    %153 = arith.divf %151, %152 : vector<2x64xf32>
    %154 = vector.extract_strided_slice %141 {offsets = [0, 128], sizes = [2, 64], strides = [1, 1]} : vector<2x256xf32> to vector<2x64xf32>
    %155 = math.tanh %154 : vector<2x64xf32>
    %156 = vector.extract_strided_slice %141 {offsets = [0, 192], sizes = [2, 64], strides = [1, 1]} : vector<2x256xf32> to vector<2x64xf32>
    %157 = arith.negf %156 : vector<2x64xf32>
    %158 = math.exp %157 : vector<2x64xf32>
    %cst_45 = arith.constant 1.000000e+00 : f32
    %159 = vector.broadcast %cst_45 : f32 to vector<2x64xf32>
    %160 = arith.addf %159, %158 : vector<2x64xf32>
    %161 = arith.divf %159, %160 : vector<2x64xf32>
    %162 = arith.mulf %153, %134 : vector<2x64xf32>
    %163 = arith.mulf %147, %155 : vector<2x64xf32>
    %164 = arith.addf %162, %163 : vector<2x64xf32>
    %165 = math.tanh %164 : vector<2x64xf32>
    %166 = arith.mulf %161, %165 : vector<2x64xf32>
    %c5_i32 = arith.constant 5 : i32
    %167 = arith.index_cast %c5_i32 : i32 to index
    %c0_46 = arith.constant 0 : index
    %c0_47 = arith.constant 0 : index
    %168 = vector.load %arg7[%167, %c0_46, %c0_47] : memref<8x2x256xf32, #tpu.memory_space<vmem>>, vector<1x2x256xf32>
    %169 = vector.shape_cast %168 : vector<1x2x256xf32> to vector<2x256xf32>
    %cst_48 = arith.constant dense<0.000000e+00> : vector<2x256xf32>
    %170 = tpu.matmul %166, %14, %cst_48 {dimension_numbers = #tpu.dot_dimension_numbers<[1], [0], [0], [1], [0, 0, 1, 1], [], []>} : vector<2x64xf32>, vector<64x256xf32>, vector<2x256xf32> -> vector<2x256xf32>
    %171 = arith.addf %169, %170 : vector<2x256xf32>
    %172 = vector.extract_strided_slice %171 {offsets = [0, 0], sizes = [2, 64], strides = [1, 1]} : vector<2x256xf32> to vector<2x64xf32>
    %173 = arith.negf %172 : vector<2x64xf32>
    %174 = math.exp %173 : vector<2x64xf32>
    %cst_49 = arith.constant 1.000000e+00 : f32
    %175 = vector.broadcast %cst_49 : f32 to vector<2x64xf32>
    %176 = arith.addf %175, %174 : vector<2x64xf32>
    %177 = arith.divf %175, %176 : vector<2x64xf32>
    %178 = vector.extract_strided_slice %171 {offsets = [0, 64], sizes = [2, 64], strides = [1, 1]} : vector<2x256xf32> to vector<2x64xf32>
    %179 = arith.negf %178 : vector<2x64xf32>
    %180 = math.exp %179 : vector<2x64xf32>
    %cst_50 = arith.constant 1.000000e+00 : f32
    %181 = vector.broadcast %cst_50 : f32 to vector<2x64xf32>
    %182 = arith.addf %181, %180 : vector<2x64xf32>
    %183 = arith.divf %181, %182 : vector<2x64xf32>
    %184 = vector.extract_strided_slice %171 {offsets = [0, 128], sizes = [2, 64], strides = [1, 1]} : vector<2x256xf32> to vector<2x64xf32>
    %185 = math.tanh %184 : vector<2x64xf32>
    %186 = vector.extract_strided_slice %171 {offsets = [0, 192], sizes = [2, 64], strides = [1, 1]} : vector<2x256xf32> to vector<2x64xf32>
    %187 = arith.negf %186 : vector<2x64xf32>
    %188 = math.exp %187 : vector<2x64xf32>
    %cst_51 = arith.constant 1.000000e+00 : f32
    %189 = vector.broadcast %cst_51 : f32 to vector<2x64xf32>
    %190 = arith.addf %189, %188 : vector<2x64xf32>
    %191 = arith.divf %189, %190 : vector<2x64xf32>
    %192 = arith.mulf %183, %164 : vector<2x64xf32>
    %193 = arith.mulf %177, %185 : vector<2x64xf32>
    %194 = arith.addf %192, %193 : vector<2x64xf32>
    %195 = math.tanh %194 : vector<2x64xf32>
    %196 = arith.mulf %191, %195 : vector<2x64xf32>
    %c6_i32 = arith.constant 6 : i32
    %197 = arith.index_cast %c6_i32 : i32 to index
    %c0_52 = arith.constant 0 : index
    %c0_53 = arith.constant 0 : index
    %198 = vector.load %arg7[%197, %c0_52, %c0_53] : memref<8x2x256xf32, #tpu.memory_space<vmem>>, vector<1x2x256xf32>
    %199 = vector.shape_cast %198 : vector<1x2x256xf32> to vector<2x256xf32>
    %cst_54 = arith.constant dense<0.000000e+00> : vector<2x256xf32>
    %200 = tpu.matmul %196, %14, %cst_54 {dimension_numbers = #tpu.dot_dimension_numbers<[1], [0], [0], [1], [0, 0, 1, 1], [], []>} : vector<2x64xf32>, vector<64x256xf32>, vector<2x256xf32> -> vector<2x256xf32>
    %201 = arith.addf %199, %200 : vector<2x256xf32>
    %202 = vector.extract_strided_slice %201 {offsets = [0, 0], sizes = [2, 64], strides = [1, 1]} : vector<2x256xf32> to vector<2x64xf32>
    %203 = arith.negf %202 : vector<2x64xf32>
    %204 = math.exp %203 : vector<2x64xf32>
    %cst_55 = arith.constant 1.000000e+00 : f32
    %205 = vector.broadcast %cst_55 : f32 to vector<2x64xf32>
    %206 = arith.addf %205, %204 : vector<2x64xf32>
    %207 = arith.divf %205, %206 : vector<2x64xf32>
    %208 = vector.extract_strided_slice %201 {offsets = [0, 64], sizes = [2, 64], strides = [1, 1]} : vector<2x256xf32> to vector<2x64xf32>
    %209 = arith.negf %208 : vector<2x64xf32>
    %210 = math.exp %209 : vector<2x64xf32>
    %cst_56 = arith.constant 1.000000e+00 : f32
    %211 = vector.broadcast %cst_56 : f32 to vector<2x64xf32>
    %212 = arith.addf %211, %210 : vector<2x64xf32>
    %213 = arith.divf %211, %212 : vector<2x64xf32>
    %214 = vector.extract_strided_slice %201 {offsets = [0, 128], sizes = [2, 64], strides = [1, 1]} : vector<2x256xf32> to vector<2x64xf32>
    %215 = math.tanh %214 : vector<2x64xf32>
    %216 = vector.extract_strided_slice %201 {offsets = [0, 192], sizes = [2, 64], strides = [1, 1]} : vector<2x256xf32> to vector<2x64xf32>
    %217 = arith.negf %216 : vector<2x64xf32>
    %218 = math.exp %217 : vector<2x64xf32>
    %cst_57 = arith.constant 1.000000e+00 : f32
    %219 = vector.broadcast %cst_57 : f32 to vector<2x64xf32>
    %220 = arith.addf %219, %218 : vector<2x64xf32>
    %221 = arith.divf %219, %220 : vector<2x64xf32>
    %222 = arith.mulf %213, %194 : vector<2x64xf32>
    %223 = arith.mulf %207, %215 : vector<2x64xf32>
    %224 = arith.addf %222, %223 : vector<2x64xf32>
    %225 = math.tanh %224 : vector<2x64xf32>
    %226 = arith.mulf %221, %225 : vector<2x64xf32>
    %c7_i32 = arith.constant 7 : i32
    %227 = arith.index_cast %c7_i32 : i32 to index
    %c0_58 = arith.constant 0 : index
    %c0_59 = arith.constant 0 : index
    %228 = vector.load %arg7[%227, %c0_58, %c0_59] : memref<8x2x256xf32, #tpu.memory_space<vmem>>, vector<1x2x256xf32>
    %229 = vector.shape_cast %228 : vector<1x2x256xf32> to vector<2x256xf32>
    %cst_60 = arith.constant dense<0.000000e+00> : vector<2x256xf32>
    %230 = tpu.matmul %226, %14, %cst_60 {dimension_numbers = #tpu.dot_dimension_numbers<[1], [0], [0], [1], [0, 0, 1, 1], [], []>} : vector<2x64xf32>, vector<64x256xf32>, vector<2x256xf32> -> vector<2x256xf32>
    %231 = arith.addf %229, %230 : vector<2x256xf32>
    %232 = vector.extract_strided_slice %231 {offsets = [0, 0], sizes = [2, 64], strides = [1, 1]} : vector<2x256xf32> to vector<2x64xf32>
    %233 = arith.negf %232 : vector<2x64xf32>
    %234 = math.exp %233 : vector<2x64xf32>
    %cst_61 = arith.constant 1.000000e+00 : f32
    %235 = vector.broadcast %cst_61 : f32 to vector<2x64xf32>
    %236 = arith.addf %235, %234 : vector<2x64xf32>
    %237 = arith.divf %235, %236 : vector<2x64xf32>
    %238 = vector.extract_strided_slice %231 {offsets = [0, 64], sizes = [2, 64], strides = [1, 1]} : vector<2x256xf32> to vector<2x64xf32>
    %239 = arith.negf %238 : vector<2x64xf32>
    %240 = math.exp %239 : vector<2x64xf32>
    %cst_62 = arith.constant 1.000000e+00 : f32
    %241 = vector.broadcast %cst_62 : f32 to vector<2x64xf32>
    %242 = arith.addf %241, %240 : vector<2x64xf32>
    %243 = arith.divf %241, %242 : vector<2x64xf32>
    %244 = vector.extract_strided_slice %231 {offsets = [0, 128], sizes = [2, 64], strides = [1, 1]} : vector<2x256xf32> to vector<2x64xf32>
    %245 = math.tanh %244 : vector<2x64xf32>
    %246 = vector.extract_strided_slice %231 {offsets = [0, 192], sizes = [2, 64], strides = [1, 1]} : vector<2x256xf32> to vector<2x64xf32>
    %247 = arith.negf %246 : vector<2x64xf32>
    %248 = math.exp %247 : vector<2x64xf32>
    %cst_63 = arith.constant 1.000000e+00 : f32
    %249 = vector.broadcast %cst_63 : f32 to vector<2x64xf32>
    %250 = arith.addf %249, %248 : vector<2x64xf32>
    %251 = arith.divf %249, %250 : vector<2x64xf32>
    %252 = arith.mulf %243, %224 : vector<2x64xf32>
    %253 = arith.mulf %237, %245 : vector<2x64xf32>
    %254 = arith.addf %252, %253 : vector<2x64xf32>
    %255 = math.tanh %254 : vector<2x64xf32>
    %256 = arith.mulf %251, %255 : vector<2x64xf32>
    %c8_i32 = arith.constant 8 : i32
    %c0_64 = arith.constant 0 : index
    %c0_65 = arith.constant 0 : index
    %257 = vector.load %arg8[%c0_64, %c0_65] : memref<2x64xf32, #tpu.memory_space<vmem>>, vector<2x64xf32>
    tpu.vector_store %arg8[%c0_64, %c0_65], %256 {strides = array<i32>} : memref<2x64xf32, #tpu.memory_space<vmem>>, vector<2x64xf32>,
    %c0_66 = arith.constant 0 : index
    %c0_67 = arith.constant 0 : index
    %258 = vector.load %arg9[%c0_66, %c0_67] : memref<2x64xf32, #tpu.memory_space<vmem>>, vector<2x64xf32>
    tpu.vector_store %arg9[%c0_66, %c0_67], %254 {strides = array<i32>} : memref<2x64xf32, #tpu.memory_space<vmem>>, vector<2x64xf32>,
    %c0_i32_68 = arith.constant 0 : i32
    %259 = arith.cmpi eq, %arg1, %c0_i32_68 : i32
    %260 = arith.extui %259 : i1 to i32
    %c0_i32_69 = arith.constant 0 : i32
    %261 = arith.cmpi ne, %260, %c0_i32_69 : i32
    scf.if %261 {
      %c0_70 = arith.constant 0 : index
      %c0_71 = arith.constant 0 : index
      %262 = vector.load %arg6[%c0_70, %c0_71] : memref<2x64xf32, #tpu.memory_space<vmem>>, vector<2x64xf32>
      tpu.vector_store %arg6[%c0_70, %c0_71], %256 {strides = array<i32>} : memref<2x64xf32, #tpu.memory_space<vmem>>, vector<2x64xf32>,
    } else {
    }
    return
  }
  func.func @transform_0(%arg0: i32, %arg1: i32) -> (i32, i32, i32) {
    %c0_i32 = arith.constant 0 : i32
    %c0_i32_0 = arith.constant 0 : i32
    return %arg1, %arg0, %c0_i32 : i32, i32, i32
  }
  func.func @transform_1(%arg0: i32, %arg1: i32) -> (i32, i32) {
    %c0_i32 = arith.constant 0 : i32
    %c0_i32_0 = arith.constant 0 : i32
    %c0_i32_1 = arith.constant 0 : i32
    return %c0_i32, %c0_i32_0 : i32, i32
  }
  func.func @transform_2(%arg0: i32, %arg1: i32) -> (i32, i32) {
    %c0_i32 = arith.constant 0 : i32
    %c0_i32_0 = arith.constant 0 : i32
    %c0_i32_1 = arith.constant 0 : i32
    return %c0_i32, %c0_i32_0 : i32, i32
  }
  func.func @transform_3(%arg0: i32, %arg1: i32) -> (i32, i32) {
    %c0_i32 = arith.constant 0 : i32
    %c0_i32_0 = arith.constant 0 : i32
    %c0_i32_1 = arith.constant 0 : i32
    return %c0_i32, %c0_i32_0 : i32, i32
  }
  func.func @transform_4(%arg0: i32, %arg1: i32) -> (i32, i32) {
    %c0_i32 = arith.constant 0 : i32
    %c0_i32_0 = arith.constant 0 : i32
    return %arg0, %c0_i32 : i32, i32
  }
}

</mosaic_0001>

<llo_original>
// kernel: tpu_custom_call.1
$region0: #{tpu_custom_call.1}
  #allocation0 [shape = 'u32[]', space=smem, size = 0x4, offset = 0x4, fixed_abs, tag = 'smem constant byte address 0x4 - core index']
  #allocation1 [shape = 'u32[144,128]{1,0:T(1,128)}', space=vmem, size = 0x12000, scoped, tag = 'internal scratch']
  #allocation2 [shape = 'f32[8,2,256]{2,1,0:T(2,128)}', space=vmem, size = 0x4000, scoped, tag = 'scratch operand']
  #allocation3 [shape = 'f32[2,64]{1,0:T(2,128)}', space=vmem, size = 0x400, scoped, tag = 'scratch operand']
  #allocation4 [shape = 'f32[2,64]{1,0:T(2,128)}', space=vmem, size = 0x400, scoped, tag = 'scratch operand']
  %s0 = inlined_call_operand.vmem [shape: f32[8,2,1], index: 0, kind: input, shape index: {}]
  %s1 = inlined_call_operand.vmem [shape: f32[1,256], index: 1, kind: input, shape index: {}]
  %s2 = inlined_call_operand.hbm [shape: f32[64,256], index: 2, kind: input, shape index: {}]
  %s3 = inlined_call_operand.vmem [shape: f32[1,256], index: 3, kind: input, shape index: {}]
  %s4 = inlined_call_operand.hbm [shape: f32[2,64], index: 4, kind: output, shape index: {}]
  %s5 = sld [smem:[#allocation0]]
  $region38: #{tpu_custom_call.1} parent=0
    _
  %s7 = ssub.s32 1, %s5
  %s8 = scalar_select 0, %s7, %s5
  $region1: #{tpu_custom_call.1} parent=0
    #allocation5 [shape = 'u8[65536]{0}', space=vmem, size = 0x10000, scoped, tag = 'input window, operand 2, single buffered']
    #allocation6 [shape = 's32[1]{0}', space=sflag, size = 0x4, scoped, tag = 'scoped memory for tpu_custom_call.1']
    #allocation7 [shape = 's32[1]{0}', space=sflag, size = 0x4, scoped, tag = 'scoped memory for tpu_custom_call.1']
    #allocation8 [shape = 'u8[1024]{0}', space=vmem, size = 0x400, scoped, tag = 'output window, operand 0, single buffered']
    %9 = vsyncpa [#allocation6], 0
    %10 = vsyncpa [#allocation7], 0
    // Predicated region
    $region2: #{tpu_custom_call.1} parent=1 // pred_check
      _
    $region3: #{tpu_custom_call.1} parent=1 // pred_check_branch
      %12 = sbr.rel (0) target = $region5
    $region4: #{tpu_custom_call.1} parent=1 // pred_region
      _
    $region5: #{tpu_custom_call.1} parent=1 // pred_fallthru
      _
    // Predicated region
    $region6: #{tpu_custom_call.1} parent=1 // pred_check
      _
    $region7: #{tpu_custom_call.1} parent=1 // pred_check_branch
      %14 = sbr.rel (0) target = $region9
    $region8: #{tpu_custom_call.1} parent=1 // pred_region
      _
    $region9: #{tpu_custom_call.1} parent=1 // pred_fallthru
      _
    // Predicated region
    $region10: #{tpu_custom_call.1} parent=1 // pred_check
      _
    $region11: #{tpu_custom_call.1} parent=1 // pred_check_branch
      %16 = sbr.rel (0) target = $region13
    $region12: #{tpu_custom_call.1} parent=1 // pred_region
      %s18 = ssub.s32 2048, 2048
      %19 = vsyncadd [#allocation6], %s18
      %s20 = sshll.u32 [#allocation5], 4
      %s21 = int_to_ptr.vmem [resolvable:$true] %s20
      %26 = dma.hbm_to_vmem [thread:$0]  %s2, 2048, %s21, [#allocation6], 256, 256, 16
    $region13: #{tpu_custom_call.1} parent=1 // pred_fallthru
      _
    // Predicated region
    $region14: #{tpu_custom_call.1} parent=1 // pred_check
      _
    $region15: #{tpu_custom_call.1} parent=1 // pred_check_branch
      %28 = sbr.rel (0) target = $region17
    $region16: #{tpu_custom_call.1} parent=1 // pred_region
      _
    $region17: #{tpu_custom_call.1} parent=1 // pred_fallthru
      _
    // Predicated region
    $region18: #{tpu_custom_call.1} parent=1 // pred_check
      _
    $region19: #{tpu_custom_call.1} parent=1 // pred_check_branch
      %30 = sbr.rel (0) target = $region21
    $region20: #{tpu_custom_call.1} parent=1 // pred_region
      %31 = dma.done [#allocation6], 2048
    $region21: #{tpu_custom_call.1} parent=1 // pred_fallthru
      _
    %p32 = scmp.eq.s32.totalorder 0, 0
    // Predicated region
    $region22: #{tpu_custom_call.1} parent=1 // pred_check
      %p33 = pneg %p32
    $region23: #{tpu_custom_call.1} parent=1 // pred_check_branch
      %35 = sbr.rel (%p33) target = $region25
    $region24: #{tpu_custom_call.1} parent=1 // pred_region
      %vm36 = vcmask 517120
      %37 = vst.msk [vmem:[#allocation3] sm:$0x3] %vm36, 0.0
      %38 = vst.msk [vmem:[#allocation4] sm:$0x3] %vm36, 0.0
    $region25: #{tpu_custom_call.1} parent=1 // pred_fallthru
      _
    %v39 = vld [vmem:[%s0] sm:$0x3]
    %v40 = vld [vmem:[%s0 + $0x2] sm:$0x3]
    %v41 = vld [vmem:[%s0 + $0x4] sm:$0x3]
    %v42 = vld [vmem:[%s0 + $0x6] sm:$0x3]
    %v43 = vld [vmem:[%s0 + $0x8] sm:$0x3]
    %v44 = vld [vmem:[%s0 + $0xa] sm:$0x3]
    %v45 = vld [vmem:[%s0 + $0xc] sm:$0x3]
    %v46 = vld [vmem:[%s0 + $0xe] sm:$0x3]
    %v47 = vld [vmem:[%s1] sm:$0x3]
    %49 = vset.pattern.permute.xlu0 0
    %50 = vperm.xlu0 %49, %v39
    %v51 = vpop.permute.xlu0 %50
    %54 = vset.pattern.permute.xlu0 0
    %55 = vperm.xlu0 %54, %v40
    %v56 = vpop.permute.xlu0 %55
    %59 = vset.pattern.permute.xlu0 0
    %60 = vperm.xlu0 %59, %v41
    %v61 = vpop.permute.xlu0 %60
    %64 = vset.pattern.permute.xlu0 0
    %65 = vperm.xlu0 %64, %v42
    %v66 = vpop.permute.xlu0 %65
    %69 = vset.pattern.permute.xlu0 0
    %70 = vperm.xlu0 %69, %v43
    %v71 = vpop.permute.xlu0 %70
    %74 = vset.pattern.permute.xlu0 0
    %75 = vperm.xlu0 %74, %v44
    %v76 = vpop.permute.xlu0 %75
    %79 = vset.pattern.permute.xlu0 0
    %80 = vperm.xlu0 %79, %v45
    %v81 = vpop.permute.xlu0 %80
    %84 = vset.pattern.permute.xlu0 0
    %85 = vperm.xlu0 %84, %v46
    %v86 = vpop.permute.xlu0 %85
    %v89 = vlaneseq
    %v90 = vshrl.u32 %v89, 7
    %v91 = vsub.s32 0, %v90
    %v92 = vrot.slane %v47, %v91
    %v93 = vlaneseq
    %v94 = vshrl.u32 %v93, 7
    %v95 = vsub.s32 1, %v94
    %v96 = vrot.slane %v47, %v95
    %v99 = vmul.f32 %v51, %v92
    %v100 = vmul.f32 %v51, %v96
    %v101 = vmul.f32 %v56, %v92
    %v102 = vmul.f32 %v56, %v96
    %v103 = vmul.f32 %v61, %v92
    %v104 = vmul.f32 %v61, %v96
    %v105 = vmul.f32 %v66, %v92
    %v106 = vmul.f32 %v66, %v96
    %v107 = vmul.f32 %v71, %v92
    %v108 = vmul.f32 %v71, %v96
    %v109 = vmul.f32 %v76, %v92
    %v110 = vmul.f32 %v76, %v96
    %v111 = vmul.f32 %v81, %v92
    %v112 = vmul.f32 %v81, %v96
    %v113 = vmul.f32 %v86, %v92
    %v114 = vmul.f32 %v86, %v96
    %v115 = vld [vmem:[%s3] sm:$0x3]
    %v117 = vlaneseq
    %v118 = vshrl.u32 %v117, 7
    %v119 = vsub.s32 0, %v118
    %v120 = vrot.slane %v115, %v119
    %v121 = vlaneseq
    %v122 = vshrl.u32 %v121, 7
    %v123 = vsub.s32 1, %v122
    %v124 = vrot.slane %v115, %v123
    %v127 = vadd.f32 %v99, %v120
    %v128 = vadd.f32 %v100, %v124
    %v129 = vadd.f32 %v101, %v120
    %v130 = vadd.f32 %v102, %v124
    %v131 = vadd.f32 %v103, %v120
    %v132 = vadd.f32 %v104, %v124
    %v133 = vadd.f32 %v105, %v120
    %v134 = vadd.f32 %v106, %v124
    %v135 = vadd.f32 %v107, %v120
    %v136 = vadd.f32 %v108, %v124
    %v137 = vadd.f32 %v109, %v120
    %v138 = vadd.f32 %v110, %v124
    %v139 = vadd.f32 %v111, %v120
    %v140 = vadd.f32 %v112, %v124
    %v141 = vadd.f32 %v113, %v120
    %v142 = vadd.f32 %v114, %v124
    %v159 = vcombine.low %v127, %v128
    %v161 = vunpack.c.l.s4 1983009808
    %v162 = vunpack.c.0.s8 %v161
    %v163 = vlaneseq
    %v164 = vshrl.u32 %v163, 7
    %v165 = vsub.s32 %v162, %v164
    %v166 = vrot.slane %v159, %v165
    %v167 = vcombine.low %v129, %v130
    %v169 = vunpack.c.l.s4 1983009808
    %v170 = vunpack.c.0.s8 %v169
    %v171 = vlaneseq
    %v172 = vshrl.u32 %v171, 7
    %v173 = vsub.s32 %v170, %v172
    %v174 = vrot.slane %v167, %v173
    %v175 = vcombine.low %v131, %v132
    %v177 = vunpack.c.l.s4 1983009808
    %v178 = vunpack.c.0.s8 %v177
    %v179 = vlaneseq
    %v180 = vshrl.u32 %v179, 7
    %v181 = vsub.s32 %v178, %v180
    %v182 = vrot.slane %v175, %v181
    %v183 = vcombine.low %v133, %v134
    %v185 = vunpack.c.l.s4 1983009808
    %v186 = vunpack.c.0.s8 %v185
    %v187 = vlaneseq
    %v188 = vshrl.u32 %v187, 7
    %v189 = vsub.s32 %v186, %v188
    %v190 = vrot.slane %v183, %v189
    %v191 = vcombine.low %v135, %v136
    %v193 = vunpack.c.l.s4 1983009808
    %v194 = vunpack.c.0.s8 %v193
    %v195 = vlaneseq
    %v196 = vshrl.u32 %v195, 7
    %v197 = vsub.s32 %v194, %v196
    %v198 = vrot.slane %v191, %v197
    %v199 = vcombine.low %v137, %v138
    %v201 = vunpack.c.l.s4 1983009808
    %v202 = vunpack.c.0.s8 %v201
    %v203 = vlaneseq
    %v204 = vshrl.u32 %v203, 7
    %v205 = vsub.s32 %v202, %v204
    %v206 = vrot.slane %v199, %v205
    %v207 = vcombine.low %v139, %v140
    %v209 = vunpack.c.l.s4 1983009808
    %v210 = vunpack.c.0.s8 %v209
    %v211 = vlaneseq
    %v212 = vshrl.u32 %v211, 7
    %v213 = vsub.s32 %v210, %v212
    %v214 = vrot.slane %v207, %v213
    %v215 = vcombine.low %v141, %v142
    %v217 = vunpack.c.l.s4 1983009808
    %v218 = vunpack.c.0.s8 %v217
    %v219 = vlaneseq
    %v220 = vshrl.u32 %v219, 7
    %v221 = vsub.s32 %v218, %v220
    %v222 = vrot.slane %v215, %v221
    %231 = vst [vmem:[#allocation2] sm:$0xf] %v166
    %232 = vst [vmem:[#allocation2 + $0x4] sm:$0xf] %v174
    %233 = vst [vmem:[#allocation2 + $0x8] sm:$0xf] %v182
    %234 = vst [vmem:[#allocation2 + $0xc] sm:$0xf] %v190
    %235 = vst [vmem:[#allocation2 + $0x10] sm:$0xf] %v198
    %236 = vst [vmem:[#allocation2 + $0x14] sm:$0xf] %v206
    %237 = vst [vmem:[#allocation2 + $0x18] sm:$0xf] %v214
    %238 = vst [vmem:[#allocation2 + $0x1c] sm:$0xf] %v222
    %v239 = vld [vmem:[#allocation5] sm:$0xff]
    %v240 = vld [vmem:[#allocation5 + $0x8] sm:$0xff]
    %v241 = vld [vmem:[#allocation5 + $0x10] sm:$0xff]
    %v242 = vld [vmem:[#allocation5 + $0x18] sm:$0xff]
    %v243 = vld [vmem:[#allocation5 + $0x20] sm:$0xff]
    %v244 = vld [vmem:[#allocation5 + $0x28] sm:$0xff]
    %v245 = vld [vmem:[#allocation5 + $0x30] sm:$0xff]
    %v246 = vld [vmem:[#allocation5 + $0x38] sm:$0xff]
    %v247 = vld [vmem:[#allocation5 + $0x40] sm:$0xff]
    %v248 = vld [vmem:[#allocation5 + $0x48] sm:$0xff]
    %v249 = vld [vmem:[#allocation5 + $0x50] sm:$0xff]
    %v250 = vld [vmem:[#allocation5 + $0x58] sm:$0xff]
    %v251 = vld [vmem:[#allocation5 + $0x60] sm:$0xff]
    %v252 = vld [vmem:[#allocation5 + $0x68] sm:$0xff]
    %v253 = vld [vmem:[#allocation5 + $0x70] sm:$0xff]
    %v254 = vld [vmem:[#allocation5 + $0x78] sm:$0xff]
    %v255 = vld [vmem:[#allocation3] sm:$0x3]
    %v256 = vld [vmem:[#allocation4] sm:$0x3]
    %v257 = vld [vmem:[#allocation2] sm:$0xf]
    %vm258 = vcmask 523264
    %v260 = vsel %vm258, %v255, 0
    %262 = vmatprep.subr.mxu0 %v240
    %263 = vmatpush1.msra.mxu0 %v239
    %264 = vmatprep.subr.mxu0 %v242
    %265 = vmatpush1.msra.mxu0 %v241
    %266 = vmatprep.subr.mxu0 %v244
    %267 = vmatpush1.msra.mxu0 %v243
    %268 = vmatprep.subr.mxu0 %v246
    %269 = vmatpush1.msra.mxu0 %v245
    %270 = vmatprep.subr.mxu0 %v248
    %271 = vmatpush1.msra.mxu0 %v247
    %272 = vmatprep.subr.mxu0 %v250
    %273 = vmatpush1.msra.mxu0 %v249
    %274 = vmatprep.subr.mxu0 %v252
    %275 = vmatpush1.msra.mxu0 %v251
    %276 = vmatprep.subr.mxu0 %v254
    %277 = vmatpush1.msra.mxu0 %v253
    %278 = vmatprep.subr.mxu0 0.0
    %279 = vmatpush1.msra.mxu0 0.0
    %280 = vmatprep.subr.mxu0 0.0
    %281 = vmatpush1.msra.mxu0 0.0
    %282 = vmatprep.subr.mxu0 0.0
    %283 = vmatpush1.msra.mxu0 0.0
    %284 = vmatprep.subr.mxu0 0.0
    %285 = vmatpush1.msra.mxu0 0.0
    %286 = vmatprep.subr.mxu0 0.0
    %287 = vmatpush1.msra.mxu0 0.0
    %288 = vmatprep.subr.mxu0 0.0
    %289 = vmatpush1.msra.mxu0 0.0
    %290 = vmatprep.subr.mxu0 0.0
    %291 = vmatpush1.msra.mxu0 0.0
    %292 = vmatprep.subr.mxu0 0.0
    %293 = vmatpush1.msra.mxu0 0.0
    %294 = vmatprep.subr.mxu0 0.0
    %295 = vmatpush1.msra.mxu0 0.0
    %296 = vmatprep.subr.mxu0 0.0
    %297 = vmatpush1.msra.mxu0 0.0
    %298 = vmatprep.subr.mxu0 0.0
    %299 = vmatpush1.msra.mxu0 0.0
    %300 = vmatprep.subr.mxu0 0.0
    %301 = vmatpush1.msra.mxu0 0.0
    %302 = vmatprep.subr.mxu0 0.0
    %303 = vmatpush1.msra.mxu0 0.0
    %304 = vmatprep.subr.mxu0 0.0
    %305 = vmatpush1.msra.mxu0 0.0
    %306 = vmatprep.subr.mxu0 0.0
    %307 = vmatpush1.msra.mxu0 0.0
    %308 = vmatprep.subr.mxu0 0.0
    %309 = vmatpush1.msra.mxu0 0.0
    %310 = vmatprep.subr.mxu0 0.0
    %311 = vmatpush1.msra.mxu0 0.0
    %312 = vmatprep.subr.mxu0 0.0
    %313 = vmatpush1.msra.mxu0 0.0
    %314 = vmatprep.subr.mxu0 0.0
    %315 = vmatpush1.msra.mxu0 0.0
    %316 = vmatprep.subr.mxu0 0.0
    %317 = vmatpush1.msra.mxu0 0.0
    %318 = vmatprep.subr.mxu0 0.0
    %319 = vmatpush1.msra.mxu0 0.0
    %320 = vmatprep.subr.mxu0 0.0
    %321 = vmatpush1.msra.mxu0 0.0
    %322 = vmatprep.subr.mxu0 0.0
    %323 = vmatpush1.msra.mxu0 0.0
    %324 = vmatprep.subr.mxu0 0.0
    %325 = vmatpush1.msra.mxu0 0.0
    %326 = vmatprep.mubr.f32.mxu0 0.0
    %327 = vmatmul.mubr.f32.gmra.mrb[0].mxu0 %v260
    %v328 = vpop.f32.mrb[0].mxu0
    %v329 = vadd.f32 0.0, %v328
    %v330 = vpop.f32.mrb[0].mxu0
    %v331 = vadd.f32 0.0, %v330
    %332 = vdwg.mxu0
    %v335 = vcombine.low %v329, %v331
    %v337 = vunpack.c.l.s4 1983009808
    %v338 = vunpack.c.0.s8 %v337
    %v339 = vlaneseq
    %v340 = vshrl.u32 %v339, 7
    %v341 = vsub.s32 %v338, %v340
    %v342 = vrot.slane %v335, %v341
    %v344 = vadd.f32 %v257, %v342
    %v345 = vxor.u32 %v344, 2147483648
    %v346 = vmul.f32 %v345, 1.442695
    %v347 = vpow.pop %v346
    %v348 = vadd.f32 %v347, 1.0
    %v349 = vrcp.pop %v348
    %v350 = vmul.f32 1.0, %v349
    %v352 = vrot.slane %v344, 2
    %v354 = vtanh.pop %v352
    %355 = vrot.lane.b32.xlu0 %v344, 64
    %v356 = vpop.permute.xlu0 %355
    %v357 = vrot.slane %v356, 2
    %v359 = vxor.u32 %v357, 2147483648
    %v360 = vmul.f32 %v359, 1.442695
    %v361 = vpow.pop %v360
    %v362 = vadd.f32 %v361, 1.0
    %v363 = vrcp.pop %v362
    %v364 = vmul.f32 1.0, %v363
    %v367 = vunpack.c.l.s4 1983009808
    %v368 = vunpack.c.0.s8 %v367
    %v369 = vlaneseq
    %v370 = vshrl.u32 %v369, 7
    %v371 = vsub.s32 %v368, %v370
    %v372 = vrot.slane %v256, %v371
    %373 = vrot.lane.b32.xlu0 %v372, 64
    %v374 = vpop.permute.xlu0 %373
    %v376 = vmul.f32 %v350, %v374
    %v377 = vmul.f32 %v350, %v354
    %379 = vrot.lane.b32.xlu0 %v377, 64
    %v380 = vpop.permute.xlu0 %379
    %v382 = vadd.f32 %v376, %v380
    %v383 = vtanh.pop %v382
    %385 = vrot.lane.b32.xlu0 %v383, 64
    %v386 = vpop.permute.xlu0 %385
    %v388 = vmul.f32 %v364, %v386
    %s389 = scalar_lea.vmem [#allocation2], 4
    %v390 = vld [vmem:[%s389] sm:$0xf]
    %v392 = vsel %vm258, %v388, 0
    %394 = vmatprep.subr.mxu0 %v240
    %395 = vmatpush1.msra.mxu0 %v239
    %396 = vmatprep.subr.mxu0 %v242
    %397 = vmatpush1.msra.mxu0 %v241
    %398 = vmatprep.subr.mxu0 %v244
    %399 = vmatpush1.msra.mxu0 %v243
    %400 = vmatprep.subr.mxu0 %v246
    %401 = vmatpush1.msra.mxu0 %v245
    %402 = vmatprep.subr.mxu0 %v248
    %403 = vmatpush1.msra.mxu0 %v247
    %404 = vmatprep.subr.mxu0 %v250
    %405 = vmatpush1.msra.mxu0 %v249
    %406 = vmatprep.subr.mxu0 %v252
    %407 = vmatpush1.msra.mxu0 %v251
    %408 = vmatprep.subr.mxu0 %v254
    %409 = vmatpush1.msra.mxu0 %v253
    %410 = vmatprep.subr.mxu0 0.0
    %411 = vmatpush1.msra.mxu0 0.0
    %412 = vmatprep.subr.mxu0 0.0
    %413 = vmatpush1.msra.mxu0 0.0
    %414 = vmatprep.subr.mxu0 0.0
    %415 = vmatpush1.msra.mxu0 0.0
    %416 = vmatprep.subr.mxu0 0.0
    %417 = vmatpush1.msra.mxu0 0.0
    %418 = vmatprep.subr.mxu0 0.0
    %419 = vmatpush1.msra.mxu0 0.0
    %420 = vmatprep.subr.mxu0 0.0
    %421 = vmatpush1.msra.mxu0 0.0
    %422 = vmatprep.subr.mxu0 0.0
    %423 = vmatpush1.msra.mxu0 0.0
    %424 = vmatprep.subr.mxu0 0.0
    %425 = vmatpush1.msra.mxu0 0.0
    %426 = vmatprep.subr.mxu0 0.0
    %427 = vmatpush1.msra.mxu0 0.0
    %428 = vmatprep.subr.mxu0 0.0
    %429 = vmatpush1.msra.mxu0 0.0
    %430 = vmatprep.subr.mxu0 0.0
    %431 = vmatpush1.msra.mxu0 0.0
    %432 = vmatprep.subr.mxu0 0.0
    %433 = vmatpush1.msra.mxu0 0.0
    %434 = vmatprep.subr.mxu0 0.0
    %435 = vmatpush1.msra.mxu0 0.0
    %436 = vmatprep.subr.mxu0 0.0
    %437 = vmatpush1.msra.mxu0 0.0
    %438 = vmatprep.subr.mxu0 0.0
    %439 = vmatpush1.msra.mxu0 0.0
    %440 = vmatprep.subr.mxu0 0.0
    %441 = vmatpush1.msra.mxu0 0.0
    %442 = vmatprep.subr.mxu0 0.0
    %443 = vmatpush1.msra.mxu0 0.0
    %444 = vmatprep.subr.mxu0 0.0
    %445 = vmatpush1.msra.mxu0 0.0
    %446 = vmatprep.subr.mxu0 0.0
    %447 = vmatpush1.msra.mxu0 0.0
    %448 = vmatprep.subr.mxu0 0.0
    %449 = vmatpush1.msra.mxu0 0.0
    %450 = vmatprep.subr.mxu0 0.0
    %451 = vmatpush1.msra.mxu0 0.0
    %452 = vmatprep.subr.mxu0 0.0
    %453 = vmatpush1.msra.mxu0 0.0
    %454 = vmatprep.subr.mxu0 0.0
    %455 = vmatpush1.msra.mxu0 0.0
    %456 = vmatprep.subr.mxu0 0.0
    %457 = vmatpush1.msra.mxu0 0.0
    %458 = vmatprep.mubr.f32.mxu0 0.0
    %459 = vmatmul.mubr.f32.gmra.mrb[0].mxu0 %v392
    %v460 = vpop.f32.mrb[0].mxu0
    %v461 = vadd.f32 0.0, %v460
    %v462 = vpop.f32.mrb[0].mxu0
    %v463 = vadd.f32 0.0, %v462
    %464 = vdwg.mxu0
    %v467 = vcombine.low %v461, %v463
    %v469 = vunpack.c.l.s4 1983009808
    %v470 = vunpack.c.0.s8 %v469
    %v471 = vlaneseq
    %v472 = vshrl.u32 %v471, 7
    %v473 = vsub.s32 %v470, %v472
    %v474 = vrot.slane %v467, %v473
    %v476 = vadd.f32 %v390, %v474
    %v477 = vxor.u32 %v476, 2147483648
    %v478 = vmul.f32 %v477, 1.442695
    %v479 = vpow.pop %v478
    %v480 = vadd.f32 %v479, 1.0
    %v481 = vrcp.pop %v480
    %v482 = vmul.f32 1.0, %v481
    %v484 = vrot.slane %v476, 2
    %v486 = vtanh.pop %v484
    %487 = vrot.lane.b32.xlu0 %v476, 64
    %v488 = vpop.permute.xlu0 %487
    %v489 = vrot.slane %v488, 2
    %v491 = vxor.u32 %v489, 2147483648
    %v492 = vmul.f32 %v491, 1.442695
    %v493 = vpow.pop %v492
    %v494 = vadd.f32 %v493, 1.0
    %v495 = vrcp.pop %v494
    %v496 = vmul.f32 1.0, %v495
    %v497 = vmul.f32 %v482, %v382
    %v498 = vmul.f32 %v482, %v486
    %500 = vrot.lane.b32.xlu0 %v498, 64
    %v501 = vpop.permute.xlu0 %500
    %v503 = vadd.f32 %v497, %v501
    %v504 = vtanh.pop %v503
    %506 = vrot.lane.b32.xlu0 %v504, 64
    %v507 = vpop.permute.xlu0 %506
    %v509 = vmul.f32 %v496, %v507
    %s510 = scalar_lea.vmem [#allocation2], 8
    %v511 = vld [vmem:[%s510] sm:$0xf]
    %v513 = vsel %vm258, %v509, 0
    %515 = vmatprep.subr.mxu0 %v240
    %516 = vmatpush1.msra.mxu0 %v239
    %517 = vmatprep.subr.mxu0 %v242
    %518 = vmatpush1.msra.mxu0 %v241
    %519 = vmatprep.subr.mxu0 %v244
    %520 = vmatpush1.msra.mxu0 %v243
    %521 = vmatprep.subr.mxu0 %v246
    %522 = vmatpush1.msra.mxu0 %v245
    %523 = vmatprep.subr.mxu0 %v248
    %524 = vmatpush1.msra.mxu0 %v247
    %525 = vmatprep.subr.mxu0 %v250
    %526 = vmatpush1.msra.mxu0 %v249
    %527 = vmatprep.subr.mxu0 %v252
    %528 = vmatpush1.msra.mxu0 %v251
    %529 = vmatprep.subr.mxu0 %v254
    %530 = vmatpush1.msra.mxu0 %v253
    %531 = vmatprep.subr.mxu0 0.0
    %532 = vmatpush1.msra.mxu0 0.0
    %533 = vmatprep.subr.mxu0 0.0
    %534 = vmatpush1.msra.mxu0 0.0
    %535 = vmatprep.subr.mxu0 0.0
    %536 = vmatpush1.msra.mxu0 0.0
    %537 = vmatprep.subr.mxu0 0.0
    %538 = vmatpush1.msra.mxu0 0.0
    %539 = vmatprep.subr.mxu0 0.0
    %540 = vmatpush1.msra.mxu0 0.0
    %541 = vmatprep.subr.mxu0 0.0
    %542 = vmatpush1.msra.mxu0 0.0
    %543 = vmatprep.subr.mxu0 0.0
    %544 = vmatpush1.msra.mxu0 0.0
    %545 = vmatprep.subr.mxu0 0.0
    %546 = vmatpush1.msra.mxu0 0.0
    %547 = vmatprep.subr.mxu0 0.0
    %548 = vmatpush1.msra.mxu0 0.0
    %549 = vmatprep.subr.mxu0 0.0
    %550 = vmatpush1.msra.mxu0 0.0
    %551 = vmatprep.subr.mxu0 0.0
    %552 = vmatpush1.msra.mxu0 0.0
    %553 = vmatprep.subr.mxu0 0.0
    %554 = vmatpush1.msra.mxu0 0.0
    %555 = vmatprep.subr.mxu0 0.0
    %556 = vmatpush1.msra.mxu0 0.0
    %557 = vmatprep.subr.mxu0 0.0
    %558 = vmatpush1.msra.mxu0 0.0
    %559 = vmatprep.subr.mxu0 0.0
    %560 = vmatpush1.msra.mxu0 0.0
    %561 = vmatprep.subr.mxu0 0.0
    %562 = vmatpush1.msra.mxu0 0.0
    %563 = vmatprep.subr.mxu0 0.0
    %564 = vmatpush1.msra.mxu0 0.0
    %565 = vmatprep.subr.mxu0 0.0
    %566 = vmatpush1.msra.mxu0 0.0
    %567 = vmatprep.subr.mxu0 0.0
    %568 = vmatpush1.msra.mxu0 0.0
    %569 = vmatprep.subr.mxu0 0.0
    %570 = vmatpush1.msra.mxu0 0.0
    %571 = vmatprep.subr.mxu0 0.0
    %572 = vmatpush1.msra.mxu0 0.0
    %573 = vmatprep.subr.mxu0 0.0
    %574 = vmatpush1.msra.mxu0 0.0
    %575 = vmatprep.subr.mxu0 0.0
    %576 = vmatpush1.msra.mxu0 0.0
    %577 = vmatprep.subr.mxu0 0.0
    %578 = vmatpush1.msra.mxu0 0.0
    %579 = vmatprep.mubr.f32.mxu0 0.0
    %580 = vmatmul.mubr.f32.gmra.mrb[0].mxu0 %v513
    %v581 = vpop.f32.mrb[0].mxu0
    %v582 = vadd.f32 0.0, %v581
    %v583 = vpop.f32.mrb[0].mxu0
    %v584 = vadd.f32 0.0, %v583
    %585 = vdwg.mxu0
    %v588 = vcombine.low %v582, %v584
    %v590 = vunpack.c.l.s4 1983009808
    %v591 = vunpack.c.0.s8 %v590
    %v592 = vlaneseq
    %v593 = vshrl.u32 %v592, 7
    %v594 = vsub.s32 %v591, %v593
    %v595 = vrot.slane %v588, %v594
    %v597 = vadd.f32 %v511, %v595
    %v598 = vxor.u32 %v597, 2147483648
    %v599 = vmul.f32 %v598, 1.442695
    %v600 = vpow.pop %v599
    %v601 = vadd.f32 %v600, 1.0
    %v602 = vrcp.pop %v601
    %v603 = vmul.f32 1.0, %v602
    %v605 = vrot.slane %v597, 2
    %v607 = vtanh.pop %v605
    %608 = vrot.lane.b32.xlu0 %v597, 64
    %v609 = vpop.permute.xlu0 %608
    %v610 = vrot.slane %v609, 2
    %v612 = vxor.u32 %v610, 2147483648
    %v613 = vmul.f32 %v612, 1.442695
    %v614 = vpow.pop %v613
    %v615 = vadd.f32 %v614, 1.0
    %v616 = vrcp.pop %v615
    %v617 = vmul.f32 1.0, %v616
    %v618 = vmul.f32 %v603, %v503
    %v619 = vmul.f32 %v603, %v607
    %621 = vrot.lane.b32.xlu0 %v619, 64
    %v622 = vpop.permute.xlu0 %621
    %v624 = vadd.f32 %v618, %v622
    %v625 = vtanh.pop %v624
    %627 = vrot.lane.b32.xlu0 %v625, 64
    %v628 = vpop.permute.xlu0 %627
    %v630 = vmul.f32 %v617, %v628
    %s631 = scalar_lea.vmem [#allocation2], 12
    %v632 = vld [vmem:[%s631] sm:$0xf]
    %v634 = vsel %vm258, %v630, 0
    %636 = vmatprep.subr.mxu0 %v240
    %637 = vmatpush1.msra.mxu0 %v239
    %638 = vmatprep.subr.mxu0 %v242
    %639 = vmatpush1.msra.mxu0 %v241
    %640 = vmatprep.subr.mxu0 %v244
    %641 = vmatpush1.msra.mxu0 %v243
    %642 = vmatprep.subr.mxu0 %v246
    %643 = vmatpush1.msra.mxu0 %v245
    %644 = vmatprep.subr.mxu0 %v248
    %645 = vmatpush1.msra.mxu0 %v247
    %646 = vmatprep.subr.mxu0 %v250
    %647 = vmatpush1.msra.mxu0 %v249
    %648 = vmatprep.subr.mxu0 %v252
    %649 = vmatpush1.msra.mxu0 %v251
    %650 = vmatprep.subr.mxu0 %v254
    %651 = vmatpush1.msra.mxu0 %v253
    %652 = vmatprep.subr.mxu0 0.0
    %653 = vmatpush1.msra.mxu0 0.0
    %654 = vmatprep.subr.mxu0 0.0
    %655 = vmatpush1.msra.mxu0 0.0
    %656 = vmatprep.subr.mxu0 0.0
    %657 = vmatpush1.msra.mxu0 0.0
    %658 = vmatprep.subr.mxu0 0.0
    %659 = vmatpush1.msra.mxu0 0.0
    %660 = vmatprep.subr.mxu0 0.0
    %661 = vmatpush1.msra.mxu0 0.0
    %662 = vmatprep.subr.mxu0 0.0
    %663 = vmatpush1.msra.mxu0 0.0
    %664 = vmatprep.subr.mxu0 0.0
    %665 = vmatpush1.msra.mxu0 0.0
    %666 = vmatprep.subr.mxu0 0.0
    %667 = vmatpush1.msra.mxu0 0.0
    %668 = vmatprep.subr.mxu0 0.0
    %669 = vmatpush1.msra.mxu0 0.0
    %670 = vmatprep.subr.mxu0 0.0
    %671 = vmatpush1.msra.mxu0 0.0
    %672 = vmatprep.subr.mxu0 0.0
    %673 = vmatpush1.msra.mxu0 0.0
    %674 = vmatprep.subr.mxu0 0.0
    %675 = vmatpush1.msra.mxu0 0.0
    %676 = vmatprep.subr.mxu0 0.0
    %677 = vmatpush1.msra.mxu0 0.0
    %678 = vmatprep.subr.mxu0 0.0
    %679 = vmatpush1.msra.mxu0 0.0
    %680 = vmatprep.subr.mxu0 0.0
    %681 = vmatpush1.msra.mxu0 0.0
    %682 = vmatprep.subr.mxu0 0.0
    %683 = vmatpush1.msra.mxu0 0.0
    %684 = vmatprep.subr.mxu0 0.0
    %685 = vmatpush1.msra.mxu0 0.0
    %686 = vmatprep.subr.mxu0 0.0
    %687 = vmatpush1.msra.mxu0 0.0
    %688 = vmatprep.subr.mxu0 0.0
    %689 = vmatpush1.msra.mxu0 0.0
    %690 = vmatprep.subr.mxu0 0.0
    %691 = vmatpush1.msra.mxu0 0.0
    %692 = vmatprep.subr.mxu0 0.0
    %693 = vmatpush1.msra.mxu0 0.0
    %694 = vmatprep.subr.mxu0 0.0
    %695 = vmatpush1.msra.mxu0 0.0
    %696 = vmatprep.subr.mxu0 0.0
    %697 = vmatpush1.msra.mxu0 0.0
    %698 = vmatprep.subr.mxu0 0.0
    %699 = vmatpush1.msra.mxu0 0.0
    %700 = vmatprep.mubr.f32.mxu0 0.0
    %701 = vmatmul.mubr.f32.gmra.mrb[0].mxu0 %v634
    %v702 = vpop.f32.mrb[0].mxu0
    %v703 = vadd.f32 0.0, %v702
    %v704 = vpop.f32.mrb[0].mxu0
    %v705 = vadd.f32 0.0, %v704
    %706 = vdwg.mxu0
    %v709 = vcombine.low %v703, %v705
    %v711 = vunpack.c.l.s4 1983009808
    %v712 = vunpack.c.0.s8 %v711
    %v713 = vlaneseq
    %v714 = vshrl.u32 %v713, 7
    %v715 = vsub.s32 %v712, %v714
    %v716 = vrot.slane %v709, %v715
    %v718 = vadd.f32 %v632, %v716
    %v719 = vxor.u32 %v718, 2147483648
    %v720 = vmul.f32 %v719, 1.442695
    %v721 = vpow.pop %v720
    %v722 = vadd.f32 %v721, 1.0
    %v723 = vrcp.pop %v722
    %v724 = vmul.f32 1.0, %v723
    %v726 = vrot.slane %v718, 2
    %v728 = vtanh.pop %v726
    %729 = vrot.lane.b32.xlu0 %v718, 64
    %v730 = vpop.permute.xlu0 %729
    %v731 = vrot.slane %v730, 2
    %v733 = vxor.u32 %v731, 2147483648
    %v734 = vmul.f32 %v733, 1.442695
    %v735 = vpow.pop %v734
    %v736 = vadd.f32 %v735, 1.0
    %v737 = vrcp.pop %v736
    %v738 = vmul.f32 1.0, %v737
    %v739 = vmul.f32 %v724, %v624
    %v740 = vmul.f32 %v724, %v728
    %742 = vrot.lane.b32.xlu0 %v740, 64
    %v743 = vpop.permute.xlu0 %742
    %v745 = vadd.f32 %v739, %v743
    %v746 = vtanh.pop %v745
    %748 = vrot.lane.b32.xlu0 %v746, 64
    %v749 = vpop.permute.xlu0 %748
    %v751 = vmul.f32 %v738, %v749
    %s752 = scalar_lea.vmem [#allocation2], 16
    %v753 = vld [vmem:[%s752] sm:$0xf]
    %v755 = vsel %vm258, %v751, 0
    %757 = vmatprep.subr.mxu0 %v240
    %758 = vmatpush1.msra.mxu0 %v239
    %759 = vmatprep.subr.mxu0 %v242
    %760 = vmatpush1.msra.mxu0 %v241
    %761 = vmatprep.subr.mxu0 %v244
    %762 = vmatpush1.msra.mxu0 %v243
    %763 = vmatprep.subr.mxu0 %v246
    %764 = vmatpush1.msra.mxu0 %v245
    %765 = vmatprep.subr.mxu0 %v248
    %766 = vmatpush1.msra.mxu0 %v247
    %767 = vmatprep.subr.mxu0 %v250
    %768 = vmatpush1.msra.mxu0 %v249
    %769 = vmatprep.subr.mxu0 %v252
    %770 = vmatpush1.msra.mxu0 %v251
    %771 = vmatprep.subr.mxu0 %v254
    %772 = vmatpush1.msra.mxu0 %v253
    %773 = vmatprep.subr.mxu0 0.0
    %774 = vmatpush1.msra.mxu0 0.0
    %775 = vmatprep.subr.mxu0 0.0
    %776 = vmatpush1.msra.mxu0 0.0
    %777 = vmatprep.subr.mxu0 0.0
    %778 = vmatpush1.msra.mxu0 0.0
    %779 = vmatprep.subr.mxu0 0.0
    %780 = vmatpush1.msra.mxu0 0.0
    %781 = vmatprep.subr.mxu0 0.0
    %782 = vmatpush1.msra.mxu0 0.0
    %783 = vmatprep.subr.mxu0 0.0
    %784 = vmatpush1.msra.mxu0 0.0
    %785 = vmatprep.subr.mxu0 0.0
    %786 = vmatpush1.msra.mxu0 0.0
    %787 = vmatprep.subr.mxu0 0.0
    %788 = vmatpush1.msra.mxu0 0.0
    %789 = vmatprep.subr.mxu0 0.0
    %790 = vmatpush1.msra.mxu0 0.0
    %791 = vmatprep.subr.mxu0 0.0
    %792 = vmatpush1.msra.mxu0 0.0
    %793 = vmatprep.subr.mxu0 0.0
    %794 = vmatpush1.msra.mxu0 0.0
    %795 = vmatprep.subr.mxu0 0.0
    %796 = vmatpush1.msra.mxu0 0.0
    %797 = vmatprep.subr.mxu0 0.0
    %798 = vmatpush1.msra.mxu0 0.0
    %799 = vmatprep.subr.mxu0 0.0
    %800 = vmatpush1.msra.mxu0 0.0
    %801 = vmatprep.subr.mxu0 0.0
    %802 = vmatpush1.msra.mxu0 0.0
    %803 = vmatprep.subr.mxu0 0.0
    %804 = vmatpush1.msra.mxu0 0.0
    %805 = vmatprep.subr.mxu0 0.0
    %806 = vmatpush1.msra.mxu0 0.0
    %807 = vmatprep.subr.mxu0 0.0
    %808 = vmatpush1.msra.mxu0 0.0
    %809 = vmatprep.subr.mxu0 0.0
    %810 = vmatpush1.msra.mxu0 0.0
    %811 = vmatprep.subr.mxu0 0.0
    %812 = vmatpush1.msra.mxu0 0.0
    %813 = vmatprep.subr.mxu0 0.0
    %814 = vmatpush1.msra.mxu0 0.0
    %815 = vmatprep.subr.mxu0 0.0
    %816 = vmatpush1.msra.mxu0 0.0
    %817 = vmatprep.subr.mxu0 0.0
    %818 = vmatpush1.msra.mxu0 0.0
    %819 = vmatprep.subr.mxu0 0.0
    %820 = vmatpush1.msra.mxu0 0.0
    %821 = vmatprep.mubr.f32.mxu0 0.0
    %822 = vmatmul.mubr.f32.gmra.mrb[0].mxu0 %v755
    %v823 = vpop.f32.mrb[0].mxu0
    %v824 = vadd.f32 0.0, %v823
    %v825 = vpop.f32.mrb[0].mxu0
    %v826 = vadd.f32 0.0, %v825
    %827 = vdwg.mxu0
    %v830 = vcombine.low %v824, %v826
    %v832 = vunpack.c.l.s4 1983009808
    %v833 = vunpack.c.0.s8 %v832
    %v834 = vlaneseq
    %v835 = vshrl.u32 %v834, 7
    %v836 = vsub.s32 %v833, %v835
    %v837 = vrot.slane %v830, %v836
    %v839 = vadd.f32 %v753, %v837
    %v840 = vxor.u32 %v839, 2147483648
    %v841 = vmul.f32 %v840, 1.442695
    %v842 = vpow.pop %v841
    %v843 = vadd.f32 %v842, 1.0
    %v844 = vrcp.pop %v843
    %v845 = vmul.f32 1.0, %v844
    %v847 = vrot.slane %v839, 2
    %v849 = vtanh.pop %v847
    %850 = vrot.lane.b32.xlu0 %v839, 64
    %v851 = vpop.permute.xlu0 %850
    %v852 = vrot.slane %v851, 2
    %v854 = vxor.u32 %v852, 2147483648
    %v855 = vmul.f32 %v854, 1.442695
    %v856 = vpow.pop %v855
    %v857 = vadd.f32 %v856, 1.0
    %v858 = vrcp.pop %v857
    %v859 = vmul.f32 1.0, %v858
    %v860 = vmul.f32 %v845, %v745
    %v861 = vmul.f32 %v845, %v849
    %863 = vrot.lane.b32.xlu0 %v861, 64
    %v864 = vpop.permute.xlu0 %863
    %v866 = vadd.f32 %v860, %v864
    %v867 = vtanh.pop %v866
    %869 = vrot.lane.b32.xlu0 %v867, 64
    %v870 = vpop.permute.xlu0 %869
    %v872 = vmul.f32 %v859, %v870
    %s873 = scalar_lea.vmem [#allocation2], 20
    %v874 = vld [vmem:[%s873] sm:$0xf]
    %v876 = vsel %vm258, %v872, 0
    %878 = vmatprep.subr.mxu0 %v240
    %879 = vmatpush1.msra.mxu0 %v239
    %880 = vmatprep.subr.mxu0 %v242
    %881 = vmatpush1.msra.mxu0 %v241
    %882 = vmatprep.subr.mxu0 %v244
    %883 = vmatpush1.msra.mxu0 %v243
    %884 = vmatprep.subr.mxu0 %v246
    %885 = vmatpush1.msra.mxu0 %v245
    %886 = vmatprep.subr.mxu0 %v248
    %887 = vmatpush1.msra.mxu0 %v247
    %888 = vmatprep.subr.mxu0 %v250
    %889 = vmatpush1.msra.mxu0 %v249
    %890 = vmatprep.subr.mxu0 %v252
    %891 = vmatpush1.msra.mxu0 %v251
    %892 = vmatprep.subr.mxu0 %v254
    %893 = vmatpush1.msra.mxu0 %v253
    %894 = vmatprep.subr.mxu0 0.0
    %895 = vmatpush1.msra.mxu0 0.0
    %896 = vmatprep.subr.mxu0 0.0
    %897 = vmatpush1.msra.mxu0 0.0
    %898 = vmatprep.subr.mxu0 0.0
    %899 = vmatpush1.msra.mxu0 0.0
    %900 = vmatprep.subr.mxu0 0.0
    %901 = vmatpush1.msra.mxu0 0.0
    %902 = vmatprep.subr.mxu0 0.0
    %903 = vmatpush1.msra.mxu0 0.0
    %904 = vmatprep.subr.mxu0 0.0
    %905 = vmatpush1.msra.mxu0 0.0
    %906 = vmatprep.subr.mxu0 0.0
    %907 = vmatpush1.msra.mxu0 0.0
    %908 = vmatprep.subr.mxu0 0.0
    %909 = vmatpush1.msra.mxu0 0.0
    %910 = vmatprep.subr.mxu0 0.0
    %911 = vmatpush1.msra.mxu0 0.0
    %912 = vmatprep.subr.mxu0 0.0
    %913 = vmatpush1.msra.mxu0 0.0
    %914 = vmatprep.subr.mxu0 0.0
    %915 = vmatpush1.msra.mxu0 0.0
    %916 = vmatprep.subr.mxu0 0.0
    %917 = vmatpush1.msra.mxu0 0.0
    %918 = vmatprep.subr.mxu0 0.0
    %919 = vmatpush1.msra.mxu0 0.0
    %920 = vmatprep.subr.mxu0 0.0
    %921 = vmatpush1.msra.mxu0 0.0
    %922 = vmatprep.subr.mxu0 0.0
    %923 = vmatpush1.msra.mxu0 0.0
    %924 = vmatprep.subr.mxu0 0.0
    %925 = vmatpush1.msra.mxu0 0.0
    %926 = vmatprep.subr.mxu0 0.0
    %927 = vmatpush1.msra.mxu0 0.0
    %928 = vmatprep.subr.mxu0 0.0
    %929 = vmatpush1.msra.mxu0 0.0
    %930 = vmatprep.subr.mxu0 0.0
    %931 = vmatpush1.msra.mxu0 0.0
    %932 = vmatprep.subr.mxu0 0.0
    %933 = vmatpush1.msra.mxu0 0.0
    %934 = vmatprep.subr.mxu0 0.0
    %935 = vmatpush1.msra.mxu0 0.0
    %936 = vmatprep.subr.mxu0 0.0
    %937 = vmatpush1.msra.mxu0 0.0
    %938 = vmatprep.subr.mxu0 0.0
    %939 = vmatpush1.msra.mxu0 0.0
    %940 = vmatprep.subr.mxu0 0.0
    %941 = vmatpush1.msra.mxu0 0.0
    %942 = vmatprep.mubr.f32.mxu0 0.0
    %943 = vmatmul.mubr.f32.gmra.mrb[0].mxu0 %v876
    %v944 = vpop.f32.mrb[0].mxu0
    %v945 = vadd.f32 0.0, %v944
    %v946 = vpop.f32.mrb[0].mxu0
    %v947 = vadd.f32 0.0, %v946
    %948 = vdwg.mxu0
    %v951 = vcombine.low %v945, %v947
    %v953 = vunpack.c.l.s4 1983009808
    %v954 = vunpack.c.0.s8 %v953
    %v955 = vlaneseq
    %v956 = vshrl.u32 %v955, 7
    %v957 = vsub.s32 %v954, %v956
    %v958 = vrot.slane %v951, %v957
    %v960 = vadd.f32 %v874, %v958
    %v961 = vxor.u32 %v960, 2147483648
    %v962 = vmul.f32 %v961, 1.442695
    %v963 = vpow.pop %v962
    %v964 = vadd.f32 %v963, 1.0
    %v965 = vrcp.pop %v964
    %v966 = vmul.f32 1.0, %v965
    %v968 = vrot.slane %v960, 2
    %v970 = vtanh.pop %v968
    %971 = vrot.lane.b32.xlu0 %v960, 64
    %v972 = vpop.permute.xlu0 %971
    %v973 = vrot.slane %v972, 2
    %v975 = vxor.u32 %v973, 2147483648
    %v976 = vmul.f32 %v975, 1.442695
    %v977 = vpow.pop %v976
    %v978 = vadd.f32 %v977, 1.0
    %v979 = vrcp.pop %v978
    %v980 = vmul.f32 1.0, %v979
    %v981 = vmul.f32 %v966, %v866
    %v982 = vmul.f32 %v966, %v970
    %984 = vrot.lane.b32.xlu0 %v982, 64
    %v985 = vpop.permute.xlu0 %984
    %v987 = vadd.f32 %v981, %v985
    %v988 = vtanh.pop %v987
    %990 = vrot.lane.b32.xlu0 %v988, 64
    %v991 = vpop.permute.xlu0 %990
    %v993 = vmul.f32 %v980, %v991
    %s994 = scalar_lea.vmem [#allocation2], 24
    %v995 = vld [vmem:[%s994] sm:$0xf]
    %v997 = vsel %vm258, %v993, 0
    %999 = vmatprep.subr.mxu0 %v240
    %1000 = vmatpush1.msra.mxu0 %v239
    %1001 = vmatprep.subr.mxu0 %v242
    %1002 = vmatpush1.msra.mxu0 %v241
    %1003 = vmatprep.subr.mxu0 %v244
    %1004 = vmatpush1.msra.mxu0 %v243
    %1005 = vmatprep.subr.mxu0 %v246
    %1006 = vmatpush1.msra.mxu0 %v245
    %1007 = vmatprep.subr.mxu0 %v248
    %1008 = vmatpush1.msra.mxu0 %v247
    %1009 = vmatprep.subr.mxu0 %v250
    %1010 = vmatpush1.msra.mxu0 %v249
    %1011 = vmatprep.subr.mxu0 %v252
    %1012 = vmatpush1.msra.mxu0 %v251
    %1013 = vmatprep.subr.mxu0 %v254
    %1014 = vmatpush1.msra.mxu0 %v253
    %1015 = vmatprep.subr.mxu0 0.0
    %1016 = vmatpush1.msra.mxu0 0.0
    %1017 = vmatprep.subr.mxu0 0.0
    %1018 = vmatpush1.msra.mxu0 0.0
    %1019 = vmatprep.subr.mxu0 0.0
    %1020 = vmatpush1.msra.mxu0 0.0
    %1021 = vmatprep.subr.mxu0 0.0
    %1022 = vmatpush1.msra.mxu0 0.0
    %1023 = vmatprep.subr.mxu0 0.0
    %1024 = vmatpush1.msra.mxu0 0.0
    %1025 = vmatprep.subr.mxu0 0.0
    %1026 = vmatpush1.msra.mxu0 0.0
    %1027 = vmatprep.subr.mxu0 0.0
    %1028 = vmatpush1.msra.mxu0 0.0
    %1029 = vmatprep.subr.mxu0 0.0
    %1030 = vmatpush1.msra.mxu0 0.0
    %1031 = vmatprep.subr.mxu0 0.0
    %1032 = vmatpush1.msra.mxu0 0.0
    %1033 = vmatprep.subr.mxu0 0.0
    %1034 = vmatpush1.msra.mxu0 0.0
    %1035 = vmatprep.subr.mxu0 0.0
    %1036 = vmatpush1.msra.mxu0 0.0
    %1037 = vmatprep.subr.mxu0 0.0
    %1038 = vmatpush1.msra.mxu0 0.0
    %1039 = vmatprep.subr.mxu0 0.0
    %1040 = vmatpush1.msra.mxu0 0.0
    %1041 = vmatprep.subr.mxu0 0.0
    %1042 = vmatpush1.msra.mxu0 0.0
    %1043 = vmatprep.subr.mxu0 0.0
    %1044 = vmatpush1.msra.mxu0 0.0
    %1045 = vmatprep.subr.mxu0 0.0
    %1046 = vmatpush1.msra.mxu0 0.0
    %1047 = vmatprep.subr.mxu0 0.0
    %1048 = vmatpush1.msra.mxu0 0.0
    %1049 = vmatprep.subr.mxu0 0.0
    %1050 = vmatpush1.msra.mxu0 0.0
    %1051 = vmatprep.subr.mxu0 0.0
    %1052 = vmatpush1.msra.mxu0 0.0
    %1053 = vmatprep.subr.mxu0 0.0
    %1054 = vmatpush1.msra.mxu0 0.0
    %1055 = vmatprep.subr.mxu0 0.0
    %1056 = vmatpush1.msra.mxu0 0.0
    %1057 = vmatprep.subr.mxu0 0.0
    %1058 = vmatpush1.msra.mxu0 0.0
    %1059 = vmatprep.subr.mxu0 0.0
    %1060 = vmatpush1.msra.mxu0 0.0
    %1061 = vmatprep.subr.mxu0 0.0
    %1062 = vmatpush1.msra.mxu0 0.0
    %1063 = vmatprep.mubr.f32.mxu0 0.0
    %1064 = vmatmul.mubr.f32.gmra.mrb[0].mxu0 %v997
    %v1065 = vpop.f32.mrb[0].mxu0
    %v1066 = vadd.f32 0.0, %v1065
    %v1067 = vpop.f32.mrb[0].mxu0
    %v1068 = vadd.f32 0.0, %v1067
    %1069 = vdwg.mxu0
    %v1072 = vcombine.low %v1066, %v1068
    %v1074 = vunpack.c.l.s4 1983009808
    %v1075 = vunpack.c.0.s8 %v1074
    %v1076 = vlaneseq
    %v1077 = vshrl.u32 %v1076, 7
    %v1078 = vsub.s32 %v1075, %v1077
    %v1079 = vrot.slane %v1072, %v1078
    %v1081 = vadd.f32 %v995, %v1079
    %v1082 = vxor.u32 %v1081, 2147483648
    %v1083 = vmul.f32 %v1082, 1.442695
    %v1084 = vpow.pop %v1083
    %v1085 = vadd.f32 %v1084, 1.0
    %v1086 = vrcp.pop %v1085
    %v1087 = vmul.f32 1.0, %v1086
    %v1089 = vrot.slane %v1081, 2
    %v1091 = vtanh.pop %v1089
    %1092 = vrot.lane.b32.xlu0 %v1081, 64
    %v1093 = vpop.permute.xlu0 %1092
    %v1094 = vrot.slane %v1093, 2
    %v1096 = vxor.u32 %v1094, 2147483648
    %v1097 = vmul.f32 %v1096, 1.442695
    %v1098 = vpow.pop %v1097
    %v1099 = vadd.f32 %v1098, 1.0
    %v1100 = vrcp.pop %v1099
    %v1101 = vmul.f32 1.0, %v1100
    %v1102 = vmul.f32 %v1087, %v987
    %v1103 = vmul.f32 %v1087, %v1091
    %1105 = vrot.lane.b32.xlu0 %v1103, 64
    %v1106 = vpop.permute.xlu0 %1105
    %v1108 = vadd.f32 %v1102, %v1106
    %v1109 = vtanh.pop %v1108
    %1111 = vrot.lane.b32.xlu0 %v1109, 64
    %v1112 = vpop.permute.xlu0 %1111
    %v1114 = vmul.f32 %v1101, %v1112
    %s1115 = scalar_lea.vmem [#allocation2], 28
    %v1116 = vld [vmem:[%s1115] sm:$0xf]
    %v1118 = vsel %vm258, %v1114, 0
    %1120 = vmatprep.subr.mxu0 %v240
    %1121 = vmatpush1.msra.mxu0 %v239
    %1122 = vmatprep.subr.mxu0 %v242
    %1123 = vmatpush1.msra.mxu0 %v241
    %1124 = vmatprep.subr.mxu0 %v244
    %1125 = vmatpush1.msra.mxu0 %v243
    %1126 = vmatprep.subr.mxu0 %v246
    %1127 = vmatpush1.msra.mxu0 %v245
    %1128 = vmatprep.subr.mxu0 %v248
    %1129 = vmatpush1.msra.mxu0 %v247
    %1130 = vmatprep.subr.mxu0 %v250
    %1131 = vmatpush1.msra.mxu0 %v249
    %1132 = vmatprep.subr.mxu0 %v252
    %1133 = vmatpush1.msra.mxu0 %v251
    %1134 = vmatprep.subr.mxu0 %v254
    %1135 = vmatpush1.msra.mxu0 %v253
    %1136 = vmatprep.subr.mxu0 0.0
    %1137 = vmatpush1.msra.mxu0 0.0
    %1138 = vmatprep.subr.mxu0 0.0
    %1139 = vmatpush1.msra.mxu0 0.0
    %1140 = vmatprep.subr.mxu0 0.0
    %1141 = vmatpush1.msra.mxu0 0.0
    %1142 = vmatprep.subr.mxu0 0.0
    %1143 = vmatpush1.msra.mxu0 0.0
    %1144 = vmatprep.subr.mxu0 0.0
    %1145 = vmatpush1.msra.mxu0 0.0
    %1146 = vmatprep.subr.mxu0 0.0
    %1147 = vmatpush1.msra.mxu0 0.0
    %1148 = vmatprep.subr.mxu0 0.0
    %1149 = vmatpush1.msra.mxu0 0.0
    %1150 = vmatprep.subr.mxu0 0.0
    %1151 = vmatpush1.msra.mxu0 0.0
    %1152 = vmatprep.subr.mxu0 0.0
    %1153 = vmatpush1.msra.mxu0 0.0
    %1154 = vmatprep.subr.mxu0 0.0
    %1155 = vmatpush1.msra.mxu0 0.0
    %1156 = vmatprep.subr.mxu0 0.0
    %1157 = vmatpush1.msra.mxu0 0.0
    %1158 = vmatprep.subr.mxu0 0.0
    %1159 = vmatpush1.msra.mxu0 0.0
    %1160 = vmatprep.subr.mxu0 0.0
    %1161 = vmatpush1.msra.mxu0 0.0
    %1162 = vmatprep.subr.mxu0 0.0
    %1163 = vmatpush1.msra.mxu0 0.0
    %1164 = vmatprep.subr.mxu0 0.0
    %1165 = vmatpush1.msra.mxu0 0.0
    %1166 = vmatprep.subr.mxu0 0.0
    %1167 = vmatpush1.msra.mxu0 0.0
    %1168 = vmatprep.subr.mxu0 0.0
    %1169 = vmatpush1.msra.mxu0 0.0
    %1170 = vmatprep.subr.mxu0 0.0
    %1171 = vmatpush1.msra.mxu0 0.0
    %1172 = vmatprep.subr.mxu0 0.0
    %1173 = vmatpush1.msra.mxu0 0.0
    %1174 = vmatprep.subr.mxu0 0.0
    %1175 = vmatpush1.msra.mxu0 0.0
    %1176 = vmatprep.subr.mxu0 0.0
    %1177 = vmatpush1.msra.mxu0 0.0
    %1178 = vmatprep.subr.mxu0 0.0
    %1179 = vmatpush1.msra.mxu0 0.0
    %1180 = vmatprep.subr.mxu0 0.0
    %1181 = vmatpush1.msra.mxu0 0.0
    %1182 = vmatprep.subr.mxu0 0.0
    %1183 = vmatpush1.msra.mxu0 0.0
    %1184 = vmatprep.mubr.f32.mxu0 0.0
    %1185 = vmatmul.mubr.f32.gmra.mrb[0].mxu0 %v1118
    %v1186 = vpop.f32.mrb[0].mxu0
    %v1187 = vadd.f32 0.0, %v1186
    %v1188 = vpop.f32.mrb[0].mxu0
    %v1189 = vadd.f32 0.0, %v1188
    %1190 = vdwg.mxu0
    %v1193 = vcombine.low %v1187, %v1189
    %v1195 = vunpack.c.l.s4 1983009808
    %v1196 = vunpack.c.0.s8 %v1195
    %v1197 = vlaneseq
    %v1198 = vshrl.u32 %v1197, 7
    %v1199 = vsub.s32 %v1196, %v1198
    %v1200 = vrot.slane %v1193, %v1199
    %v1202 = vadd.f32 %v1116, %v1200
    %v1203 = vxor.u32 %v1202, 2147483648
    %v1204 = vmul.f32 %v1203, 1.442695
    %v1205 = vpow.pop %v1204
    %v1206 = vadd.f32 %v1205, 1.0
    %v1207 = vrcp.pop %v1206
    %v1208 = vmul.f32 1.0, %v1207
    %v1210 = vrot.slane %v1202, 2
    %v1212 = vtanh.pop %v1210
    %1213 = vrot.lane.b32.xlu0 %v1202, 64
    %v1214 = vpop.permute.xlu0 %1213
    %v1215 = vrot.slane %v1214, 2
    %v1217 = vxor.u32 %v1215, 2147483648
    %v1218 = vmul.f32 %v1217, 1.442695
    %v1219 = vpow.pop %v1218
    %v1220 = vadd.f32 %v1219, 1.0
    %v1221 = vrcp.pop %v1220
    %v1222 = vmul.f32 1.0, %v1221
    %v1223 = vmul.f32 %v1208, %v1108
    %v1224 = vmul.f32 %v1208, %v1212
    %1226 = vrot.lane.b32.xlu0 %v1224, 64
    %v1227 = vpop.permute.xlu0 %1226
    %v1229 = vadd.f32 %v1223, %v1227
    %v1230 = vtanh.pop %v1229
    %1232 = vrot.lane.b32.xlu0 %v1230, 64
    %v1233 = vpop.permute.xlu0 %1232
    %v1235 = vmul.f32 %v1222, %v1233
    %vm1236 = vcmask 517120
    %1237 = vst.msk [vmem:[#allocation3] sm:$0x3] %vm1236, %v1235
    %v1240 = vunpack.c.l.s4 1983009808
    %v1241 = vunpack.c.0.s8 %v1240
    %v1242 = vlaneseq
    %v1243 = vshrl.u32 %v1242, 7
    %v1244 = vsub.s32 %v1241, %v1243
    %v1245 = vrot.slane %v1229, %v1244
    %1246 = vrot.lane.b32.xlu0 %v1245, 64
    %v1247 = vpop.permute.xlu0 %1246
    %1249 = vst.msk [vmem:[#allocation4] sm:$0x3] %vm1236, %v1247
    // Predicated region
    $region26: #{tpu_custom_call.1} parent=1 // pred_check
      %p1250 = pneg %p32
    $region27: #{tpu_custom_call.1} parent=1 // pred_check_branch
      %1252 = sbr.rel (%p1250) target = $region29
    $region28: #{tpu_custom_call.1} parent=1 // pred_region
      %1253 = vst.msk [vmem:[#allocation8] sm:$0x3] %vm1236, %v1235
    $region29: #{tpu_custom_call.1} parent=1 // pred_fallthru
      _
    // Predicated region
    $region30: #{tpu_custom_call.1} parent=1 // pred_check
      _
    $region31: #{tpu_custom_call.1} parent=1 // pred_check_branch
      %1255 = sbr.rel (0) target = $region33
    $region32: #{tpu_custom_call.1} parent=1 // pred_region
      %s1257 = ssub.s32 32, 32
      %1258 = vsyncadd [#allocation7], %s1257
      %s1260 = sshll.u32 [#allocation8], 4
      %s1261 = int_to_ptr.vmem [resolvable:$true] %s1260
      %1263 = dma.vmem_to_hbm [thread:$0]  %s1261, 32, %s4, [#allocation7]
    $region33: #{tpu_custom_call.1} parent=1 // pred_fallthru
      _
    // Predicated region
    $region34: #{tpu_custom_call.1} parent=1 // pred_check
      _
    $region35: #{tpu_custom_call.1} parent=1 // pred_check_branch
      %1265 = sbr.rel (0) target = $region37
    $region36: #{tpu_custom_call.1} parent=1 // pred_region
      %1266 = dma.done [#allocation7], 32
    $region37: #{tpu_custom_call.1} parent=1 // pred_fallthru
      _
    %1267 = vsyncpa [#allocation6], 1
    %1268 = vsyncpa [#allocation7], 1

</llo_original>
